<compile_context>
chip_gen: v7x
topology: tpu7x:2x2x1
jax: 0.10.0
libtpu: 0.0.40
codegen_flags: <defaults>
</compile_context>

<pallas_src>
import functools

import jax
import jax.numpy as jnp
from jax.experimental import pallas as pl
from jax.experimental.pallas import tpu as pltpu

KSIZE = 3                   # 3x3 filters in MultiDilation's ConvLayers
EPS = 1e-5                  # nn.BatchNorm2d default eps
NEG_SLOPE = 0.2             # LeakyReLU(0.2)
MXU_DTYPE = jnp.bfloat16    # MXU operand dtype (f32 accumulate); set to
                            # jnp.float32 for bit-closer-to-PyTorch numerics.

_COMPILER_PARAMS = pltpu.CompilerParams(
    # The batch axis is fully independent -> shard across both TCs on v7x.
    dimension_semantics=("parallel",),
    # Explicit scoped-VMEM budget (well under v7x's 64 MiB physical VMEM);
    # re-derive together with the tile size if H*W grows.
    vmem_limit_bytes=32 * 1024 * 1024,
)


def _conv_stats_kernel(x_ref, w_ref, b_ref, pscale_ref, pshift_ref,
                       z_ref, stats_ref, xpad_ref, slab_ref,
                       *, dilation, apply_pre):
    """Dilated 3x3 conv (one im2col MXU matmul) + per-image BN partial sums.

    x_ref     : (1, Cin, H*W)   channels-first, lane-dense image tile
    w_ref     : (9*Cin, Cout)   conv weights, (ky, kx, cin)-major, MXU dtype
    b_ref     : (1, Cout)       conv bias (f32)
    pscale_ref: (Cin, 1)        fused previous-stage BN scale (f32)
    pshift_ref: (Cin, 1)        fused previous-stage BN shift (f32)
    z_ref     : (1, Cout, H*W)  conv + bias output (f32, pre-BN), lane-dense
    stats_ref : (1, 2, Cout)    per-image [sum; sum-of-squares] over H*W
    xpad_ref  : (Hp, Wp, Cin)   VMEM scratch: zero-padded image
    slab_ref  : (H*W, 9*Cin)    VMEM scratch: im2col slab
    """
    cin = x_ref.shape[1]
    pad = dilation
    hp, wp = xpad_ref.shape[0], xpad_ref.shape[1]
    h, w = hp - 2 * pad, wp - 2 * pad

    # Lane-dense load; optionally fuse the previous stage's BN + LeakyReLU
    # (in f32).  Doing it here, before padding, keeps the zero halo exact and
    # removes a full HBM round trip of the intermediate activation.
    xin = x_ref[0].astype(jnp.float32)                          # (Cin, H*W)
    if apply_pre:
        xin = xin * pscale_ref[...] + pshift_ref[...]
        xin = jnp.where(xin >= 0, xin, NEG_SLOPE * xin)

    # In-kernel zero padding into a VMEM scratch (no wrapper-side jnp.pad).
    xpad_ref[...] = jnp.zeros(xpad_ref.shape, xpad_ref.dtype)
    xpad_ref[pad:pad + h, pad:pad + w, :] = xin.T.reshape(h, w, cin)

    # im2col: build one (H*W, 9*Cin) slab -> a single MXU matmul with K=9*Cin.
    for ky in range(KSIZE):
        for kx in range(KSIZE):
            t = ky * KSIZE + kx
            tap = xpad_ref[ky * dilation:ky * dilation + h,
                           kx * dilation:kx * dilation + w, :]  # (H, W, Cin)
            slab_ref[:, t * cin:(t + 1) * cin] = tap.reshape(h * w, cin)

    y = jnp.dot(slab_ref[...].astype(w_ref.dtype), w_ref[...],
                preferred_element_type=jnp.float32)             # (H*W, Cout)
    y = y + b_ref[...]

    # Per-image partial sums for the two-pass (batch-statistics) BatchNorm.
    s = jnp.sum(y, axis=0, keepdims=True)                       # (1, Cout)
    sq = jnp.sum(y * y, axis=0, keepdims=True)                  # (1, Cout)
    stats_ref[...] = jnp.concatenate([s, sq], axis=0)[None, :, :]

    # Store channels-first so the output slab stays lane-dense (last dim=H*W).
    z_ref[...] = y.T[None, :, :].astype(z_ref.dtype)


def _conv_stage(x_flat, h, w, w_hwio, bias, *, dilation,
                pre_scale=None, pre_shift=None, mxu_dtype=MXU_DTYPE):
    """One ConvLayer: (optional fused previous BN/act) -> conv -> BN partials."""
    n, cin, hw = x_flat.shape
    cout = w_hwio.shape[-1]
    pad = dilation
    hp, wp = h + 2 * pad, w + 2 * pad

    apply_pre = pre_scale is not None
    if pre_scale is None:
        pre_scale = jnp.ones((cin,), jnp.float32)
        pre_shift = jnp.zeros((cin,), jnp.float32)

    kernel = functools.partial(_conv_stats_kernel,
                               dilation=dilation, apply_pre=apply_pre)
    z, stats = pl.pallas_call(
        kernel,
        grid=(n,),
        in_specs=[
            pl.BlockSpec((1, cin, hw), lambda i: (i, 0, 0)),
            pl.BlockSpec((KSIZE * KSIZE * cin, cout), lambda i: (0, 0)),
            pl.BlockSpec((1, cout), lambda i: (0, 0)),
            pl.BlockSpec((cin, 1), lambda i: (0, 0)),
            pl.BlockSpec((cin, 1), lambda i: (0, 0)),
        ],
        out_specs=[
            pl.BlockSpec((1, cout, hw), lambda i: (i, 0, 0)),
            pl.BlockSpec((1, 2, cout), lambda i: (i, 0, 0)),
        ],
        out_shape=(jax.ShapeDtypeStruct((n, cout, hw), jnp.float32),
                   jax.ShapeDtypeStruct((n, 2, cout), jnp.float32)),
        scratch_shapes=[
            pltpu.VMEM((hp, wp, cin), jnp.float32),
            pltpu.VMEM((h * w, KSIZE * KSIZE * cin), jnp.float32),
        ],
        compiler_params=_COMPILER_PARAMS,
    )(x_flat,
      w_hwio.reshape(KSIZE * KSIZE * cin, cout).astype(mxu_dtype),
      bias.reshape(1, cout).astype(jnp.float32),
      pre_scale.reshape(cin, 1).astype(jnp.float32),
      pre_shift.reshape(cin, 1).astype(jnp.float32))
    return z, stats


def _bn_scale_shift(stats, gamma, beta, count):
    """Fold batch statistics + BN affine params into per-channel scale/shift."""
    tot = jnp.sum(stats, axis=0)                                # (2, C)
    mean = tot[0] / count
    var = jnp.maximum(tot[1] / count - mean * mean, 0.0)        # biased var
    scale = gamma * jax.lax.rsqrt(var + EPS)
    shift = beta - mean * scale
    return scale, shift


def _bn_affine_kernel(z_ref, scale_ref, shift_ref, o_ref):
    o_ref[...] = (z_ref[...] * scale_ref[...] + shift_ref[...]).astype(o_ref.dtype)


def _bn_affine(z, scale, shift):
    """Final BatchNorm affine (no activation), lane-dense elementwise kernel."""
    n, c, hw = z.shape
    return pl.pallas_call(
        _bn_affine_kernel,
        grid=(n,),
        in_specs=[
            pl.BlockSpec((1, c, hw), lambda i: (i, 0, 0)),
            pl.BlockSpec((1, c, 1), lambda i: (0, 0, 0)),
            pl.BlockSpec((1, c, 1), lambda i: (0, 0, 0)),
        ],
        out_specs=pl.BlockSpec((1, c, hw), lambda i: (i, 0, 0)),
        out_shape=jax.ShapeDtypeStruct((n, c, hw), jnp.float32),
        compiler_params=_COMPILER_PARAMS,
    )(z, scale.reshape(1, c, 1), shift.reshape(1, c, 1))


def multi_dilation_forward(x_nchw, params, *, dilation=2):
    """Pallas implementation of MultiDilation.forward (NCHW in / NCHW out)."""
    n, c, h, w = x_nchw.shape
    hw = h * w
    count = n * hw
    x = x_nchw.reshape(n, c, hw)            # free reshape, no transpose

    # stage 1: conv + bias + BN partials (BN1 + LeakyReLU fused into stage 2)
    z1, st1 = _conv_stage(x, h, w, params["w1"], params["b1"], dilation=dilation)
    sc1, sh1 = _bn_scale_shift(st1, params["g1"], params["be1"], count)

    # stage 2: fused [BN1 + LeakyReLU] -> conv + bias + BN partials
    z2, st2 = _conv_stage(z1, h, w, params["w2"], params["b2"], dilation=dilation,
                          pre_scale=sc1, pre_shift=sh1)
    sc2, sh2 = _bn_scale_shift(st2, params["g2"], params["be2"], count)

    out = _bn_affine(z2, sc2, sh2)
    # TODO(synk): BatchNorm running_mean/running_var buffer updates are a
    # training-only side effect that does not change the forward output.
    return out.reshape(n, c, h, w)


def _reference_forward(x_nchw, params, *, dilation=2, conv_dtype=jnp.float32):
    """Pure-JAX reference.  conv_dtype=f32 reproduces the PyTorch module;
    conv_dtype=bf16 mirrors the kernel's MXU-operand rounding."""
    d = dilation

    def conv(x, w, b):
        y = jax.lax.conv_general_dilated(
            x.astype(conv_dtype), w.astype(conv_dtype),
            window_strides=(1, 1), padding=((d, d), (d, d)),
            rhs_dilation=(d, d),
            dimension_numbers=("NCHW", "HWIO", "NCHW"),
            preferred_element_type=jnp.float32)
        return y + b[None, :, None, None]

    def bn(y, g, be):
        mu = jnp.mean(y, axis=(0, 2, 3), keepdims=True)
        var = jnp.mean(jnp.square(y - mu), axis=(0, 2, 3), keepdims=True)
        y = (y - mu) * jax.lax.rsqrt(var + EPS)
        return y * g[None, :, None, None] + be[None, :, None, None]

    y = bn(conv(x_nchw, params["w1"], params["b1"]), params["g1"], params["be1"])
    y = jnp.where(y >= 0, y, NEG_SLOPE * y)
    y = bn(conv(y, params["w2"], params["b2"]), params["g2"], params["be2"])
    return y


def init_params(key, dim_out):
    """Deterministic synthetic parameters matching MultiDilation(dim_out)."""
    ks = jax.random.split(key, 8)

    def conv_w(k):   # HWIO
        return 0.1 * jax.random.normal(k, (KSIZE, KSIZE, dim_out, dim_out),
                                       jnp.float32)

    def vec(k, off=0.0):
        return off + 0.1 * jax.random.normal(k, (dim_out,), jnp.float32)

    return {
        "w1": conv_w(ks[0]), "b1": vec(ks[1]),
        "g1": vec(ks[2], 1.0), "be1": vec(ks[3]),
        "w2": conv_w(ks[4]), "b2": vec(ks[5]),
        "g2": vec(ks[6], 1.0), "be2": vec(ks[7]),
    }


if __name__ == "__main__":
    key = jax.random.PRNGKey(0)
    k_x, k_p = jax.random.split(key)

    batch, dim_out, spatial = 2, 8, 16
    x = jax.random.normal(k_x, (batch, dim_out, spatial, spatial), jnp.float32)
    params = init_params(k_p, dim_out)

    out = jax.block_until_ready(multi_dilation_forward(x, params, dilation=2))
    assert out.shape == (batch, dim_out, spatial, spatial)

    # Tight check vs a reference whose conv operands are also rounded to the
    # MXU dtype (isolates kernel-structure bugs from bf16 rounding)...
    ref_mxu = _reference_forward(x, params, dilation=2, conv_dtype=MXU_DTYPE)
    err_mxu = float(jnp.max(jnp.abs(out - ref_mxu)))
    assert err_mxu < 5e-3, f"mismatch vs MXU-dtype reference: {err_mxu}"

    # ... and a looser check vs the full-f32 reference (PyTorch semantics);
    # the remaining gap is only bf16 MXU-operand rounding.
    ref_f32 = _reference_forward(x, params, dilation=2, conv_dtype=jnp.float32)
    err_f32 = float(jnp.max(jnp.abs(out - ref_f32)))
    assert err_f32 < 5e-2, f"mismatch vs f32 reference: {err_f32}"

    print("KERNEL_OK")
</pallas_src>

<mosaic_0001>
module attributes {stable_mosaic.version = 11 : i64} {
  func.func @_conv_stats_kernel(%arg0: i32, %arg1: memref<1x8x256xf32, #tpu.memory_space<vmem>>, %arg2: memref<72x8xbf16, #tpu.memory_space<vmem>>, %arg3: memref<1x8xf32, #tpu.memory_space<vmem>>, %arg4: memref<8x1xf32, #tpu.memory_space<vmem>>, %arg5: memref<8x1xf32, #tpu.memory_space<vmem>>, %arg6: memref<1x8x256xf32, #tpu.memory_space<vmem>>, %arg7: memref<1x2x8xf32, #tpu.memory_space<vmem>>, %arg8: memref<20x20x8xf32, #tpu.memory_space<vmem>>, %arg9: memref<256x72xf32, #tpu.memory_space<vmem>>) attributes {dimension_semantics = [#tpu.dimension_semantics<parallel>], iteration_bounds = array<i64: 2>, scalar_prefetch = 0 : i64, scratch_operands = 2 : i64, tpu.core_type = #tpu.core_type<tc>, window_params = [{transform_indices = @transform_0, window_bounds = array<i64: 1, 8, 256>}, {pipeline_mode = #tpu.pipeline_mode<synchronous>, transform_indices = @transform_1, window_bounds = array<i64: 72, 8>}, {pipeline_mode = #tpu.pipeline_mode<synchronous>, transform_indices = @transform_2, window_bounds = array<i64: 1, 8>}, {pipeline_mode = #tpu.pipeline_mode<synchronous>, transform_indices = @transform_3, window_bounds = array<i64: 8, 1>}, {pipeline_mode = #tpu.pipeline_mode<synchronous>, transform_indices = @transform_4, window_bounds = array<i64: 8, 1>}, {transform_indices = @transform_5, window_bounds = array<i64: 1, 8, 256>}, {transform_indices = @transform_6, window_bounds = array<i64: 1, 2, 8>}]} {
    %c0 = arith.constant 0 : index
    %c0_0 = arith.constant 0 : index
    %c0_1 = arith.constant 0 : index
    %0 = vector.load %arg1[%c0, %c0_0, %c0_1] : memref<1x8x256xf32, #tpu.memory_space<vmem>>, vector<1x8x256xf32>
    %1 = vector.shape_cast %0 : vector<1x8x256xf32> to vector<8x256xf32>
    %cst = arith.constant 0.000000e+00 : f32
    %2 = vector.broadcast %cst : f32 to vector<20x20x8xf32>
    %c0_2 = arith.constant 0 : index
    %c0_3 = arith.constant 0 : index
    %c0_4 = arith.constant 0 : index
    %3 = vector.load %arg8[%c0_2, %c0_3, %c0_4] : memref<20x20x8xf32, #tpu.memory_space<vmem>>, vector<20x20x8xf32>
    tpu.vector_store %arg8[%c0_2, %c0_3, %c0_4], %2 {strides = array<i32>} : memref<20x20x8xf32, #tpu.memory_space<vmem>>, vector<20x20x8xf32>,
    %4 = tpu.transpose %1, [1, 0] : vector<8x256xf32> -> vector<256x8xf32>
    %5 = vector.shape_cast %4 : vector<256x8xf32> to vector<16x16x8xf32>
    %c2 = arith.constant 2 : index
    %c2_5 = arith.constant 2 : index
    %c0_6 = arith.constant 0 : index
    %6 = vector.load %arg8[%c2, %c2_5, %c0_6] : memref<20x20x8xf32, #tpu.memory_space<vmem>>, vector<16x16x8xf32>
    tpu.vector_store %arg8[%c2, %c2_5, %c0_6], %5 {strides = array<i32>} : memref<20x20x8xf32, #tpu.memory_space<vmem>>, vector<16x16x8xf32>,
    %c0_7 = arith.constant 0 : index
    %c0_8 = arith.constant 0 : index
    %c0_9 = arith.constant 0 : index
    %7 = vector.load %arg8[%c0_7, %c0_8, %c0_9] : memref<20x20x8xf32, #tpu.memory_space<vmem>>, vector<16x16x8xf32>
    %8 = vector.shape_cast %7 : vector<16x16x8xf32> to vector<256x8xf32>
    %c0_10 = arith.constant 0 : index
    %c0_11 = arith.constant 0 : index
    %9 = vector.load %arg9[%c0_10, %c0_11] : memref<256x72xf32, #tpu.memory_space<vmem>>, vector<256x8xf32>
    tpu.vector_store %arg9[%c0_10, %c0_11], %8 {strides = array<i32>} : memref<256x72xf32, #tpu.memory_space<vmem>>, vector<256x8xf32>,
    %c0_12 = arith.constant 0 : index
    %c2_13 = arith.constant 2 : index
    %c0_14 = arith.constant 0 : index
    %10 = vector.load %arg8[%c0_12, %c2_13, %c0_14] : memref<20x20x8xf32, #tpu.memory_space<vmem>>, vector<16x16x8xf32>
    %11 = vector.shape_cast %10 : vector<16x16x8xf32> to vector<256x8xf32>
    %c0_15 = arith.constant 0 : index
    %c8 = arith.constant 8 : index
    %12 = vector.load %arg9[%c0_15, %c8] : memref<256x72xf32, #tpu.memory_space<vmem>>, vector<256x8xf32>
    tpu.vector_store %arg9[%c0_15, %c8], %11 {strides = array<i32>} : memref<256x72xf32, #tpu.memory_space<vmem>>, vector<256x8xf32>,
    %c0_16 = arith.constant 0 : index
    %c4 = arith.constant 4 : index
    %c0_17 = arith.constant 0 : index
    %13 = vector.load %arg8[%c0_16, %c4, %c0_17] : memref<20x20x8xf32, #tpu.memory_space<vmem>>, vector<16x16x8xf32>
    %14 = vector.shape_cast %13 : vector<16x16x8xf32> to vector<256x8xf32>
    %c0_18 = arith.constant 0 : index
    %c16 = arith.constant 16 : index
    %15 = vector.load %arg9[%c0_18, %c16] : memref<256x72xf32, #tpu.memory_space<vmem>>, vector<256x8xf32>
    tpu.vector_store %arg9[%c0_18, %c16], %14 {strides = array<i32>} : memref<256x72xf32, #tpu.memory_space<vmem>>, vector<256x8xf32>,
    %c2_19 = arith.constant 2 : index
    %c0_20 = arith.constant 0 : index
    %c0_21 = arith.constant 0 : index
    %16 = vector.load %arg8[%c2_19, %c0_20, %c0_21] : memref<20x20x8xf32, #tpu.memory_space<vmem>>, vector<16x16x8xf32>
    %17 = vector.shape_cast %16 : vector<16x16x8xf32> to vector<256x8xf32>
    %c0_22 = arith.constant 0 : index
    %c24 = arith.constant 24 : index
    %18 = vector.load %arg9[%c0_22, %c24] : memref<256x72xf32, #tpu.memory_space<vmem>>, vector<256x8xf32>
    tpu.vector_store %arg9[%c0_22, %c24], %17 {strides = array<i32>} : memref<256x72xf32, #tpu.memory_space<vmem>>, vector<256x8xf32>,
    %c2_23 = arith.constant 2 : index
    %c2_24 = arith.constant 2 : index
    %c0_25 = arith.constant 0 : index
    %19 = vector.load %arg8[%c2_23, %c2_24, %c0_25] : memref<20x20x8xf32, #tpu.memory_space<vmem>>, vector<16x16x8xf32>
    %20 = vector.shape_cast %19 : vector<16x16x8xf32> to vector<256x8xf32>
    %c0_26 = arith.constant 0 : index
    %c32 = arith.constant 32 : index
    %21 = vector.load %arg9[%c0_26, %c32] : memref<256x72xf32, #tpu.memory_space<vmem>>, vector<256x8xf32>
    tpu.vector_store %arg9[%c0_26, %c32], %20 {strides = array<i32>} : memref<256x72xf32, #tpu.memory_space<vmem>>, vector<256x8xf32>,
    %c2_27 = arith.constant 2 : index
    %c4_28 = arith.constant 4 : index
    %c0_29 = arith.constant 0 : index
    %22 = vector.load %arg8[%c2_27, %c4_28, %c0_29] : memref<20x20x8xf32, #tpu.memory_space<vmem>>, vector<16x16x8xf32>
    %23 = vector.shape_cast %22 : vector<16x16x8xf32> to vector<256x8xf32>
    %c0_30 = arith.constant 0 : index
    %c40 = arith.constant 40 : index
    %24 = vector.load %arg9[%c0_30, %c40] : memref<256x72xf32, #tpu.memory_space<vmem>>, vector<256x8xf32>
    tpu.vector_store %arg9[%c0_30, %c40], %23 {strides = array<i32>} : memref<256x72xf32, #tpu.memory_space<vmem>>, vector<256x8xf32>,
    %c4_31 = arith.constant 4 : index
    %c0_32 = arith.constant 0 : index
    %c0_33 = arith.constant 0 : index
    %25 = vector.load %arg8[%c4_31, %c0_32, %c0_33] : memref<20x20x8xf32, #tpu.memory_space<vmem>>, vector<16x16x8xf32>
    %26 = vector.shape_cast %25 : vector<16x16x8xf32> to vector<256x8xf32>
    %c0_34 = arith.constant 0 : index
    %c48 = arith.constant 48 : index
    %27 = vector.load %arg9[%c0_34, %c48] : memref<256x72xf32, #tpu.memory_space<vmem>>, vector<256x8xf32>
    tpu.vector_store %arg9[%c0_34, %c48], %26 {strides = array<i32>} : memref<256x72xf32, #tpu.memory_space<vmem>>, vector<256x8xf32>,
    %c4_35 = arith.constant 4 : index
    %c2_36 = arith.constant 2 : index
    %c0_37 = arith.constant 0 : index
    %28 = vector.load %arg8[%c4_35, %c2_36, %c0_37] : memref<20x20x8xf32, #tpu.memory_space<vmem>>, vector<16x16x8xf32>
    %29 = vector.shape_cast %28 : vector<16x16x8xf32> to vector<256x8xf32>
    %c0_38 = arith.constant 0 : index
    %c56 = arith.constant 56 : index
    %30 = vector.load %arg9[%c0_38, %c56] : memref<256x72xf32, #tpu.memory_space<vmem>>, vector<256x8xf32>
    tpu.vector_store %arg9[%c0_38, %c56], %29 {strides = array<i32>} : memref<256x72xf32, #tpu.memory_space<vmem>>, vector<256x8xf32>,
    %c4_39 = arith.constant 4 : index
    %c4_40 = arith.constant 4 : index
    %c0_41 = arith.constant 0 : index
    %31 = vector.load %arg8[%c4_39, %c4_40, %c0_41] : memref<20x20x8xf32, #tpu.memory_space<vmem>>, vector<16x16x8xf32>
    %32 = vector.shape_cast %31 : vector<16x16x8xf32> to vector<256x8xf32>
    %c0_42 = arith.constant 0 : index
    %c64 = arith.constant 64 : index
    %33 = vector.load %arg9[%c0_42, %c64] : memref<256x72xf32, #tpu.memory_space<vmem>>, vector<256x8xf32>
    tpu.vector_store %arg9[%c0_42, %c64], %32 {strides = array<i32>} : memref<256x72xf32, #tpu.memory_space<vmem>>, vector<256x8xf32>,
    %c0_43 = arith.constant 0 : index
    %c0_44 = arith.constant 0 : index
    %34 = vector.load %arg9[%c0_43, %c0_44] : memref<256x72xf32, #tpu.memory_space<vmem>>, vector<256x72xf32>
    %35 = arith.truncf %34 : vector<256x72xf32> to vector<256x72xbf16>
    %c0_45 = arith.constant 0 : index
    %c0_46 = arith.constant 0 : index
    %36 = vector.load %arg2[%c0_45, %c0_46] : memref<72x8xbf16, #tpu.memory_space<vmem>>, vector<72x8xbf16>
    %cst_47 = arith.constant dense<0.000000e+00> : vector<256x8xf32>
    %37 = tpu.matmul %35, %36, %cst_47 {dimension_numbers = #tpu.dot_dimension_numbers<[1], [0], [0], [1], [0, 0, 1, 1], [], []>} : vector<256x72xbf16>, vector<72x8xbf16>, vector<256x8xf32> -> vector<256x8xf32>
    %c0_48 = arith.constant 0 : index
    %c0_49 = arith.constant 0 : index
    %38 = vector.load %arg3[%c0_48, %c0_49] : memref<1x8xf32, #tpu.memory_space<vmem>>, vector<1x8xf32>
    %39 = vector.broadcast %38 : vector<1x8xf32> to vector<256x8xf32>
    %40 = arith.addf %37, %39 : vector<256x8xf32>
    %cst_50 = arith.constant dense<0.000000e+00> : vector<8xf32>
    %41 = vector.multi_reduction <add>, %40, %cst_50 [0] : vector<256x8xf32> to vector<8xf32>
    %42 = vector.shape_cast %41 : vector<8xf32> to vector<1x8xf32>
    %43 = arith.mulf %40, %40 : vector<256x8xf32>
    %cst_51 = arith.constant dense<0.000000e+00> : vector<8xf32>
    %44 = vector.multi_reduction <add>, %43, %cst_51 [0] : vector<256x8xf32> to vector<8xf32>
    %45 = vector.shape_cast %44 : vector<8xf32> to vector<1x8xf32>
    %46 = tpu.concatenate %42, %45 in 0 : vector<1x8xf32>, vector<1x8xf32> -> vector<2x8xf32>
    %47 = vector.shape_cast %46 : vector<2x8xf32> to vector<1x2x8xf32>
    %c0_52 = arith.constant 0 : index
    %c0_53 = arith.constant 0 : index
    %c0_54 = arith.constant 0 : index
    %48 = vector.load %arg7[%c0_52, %c0_53, %c0_54] : memref<1x2x8xf32, #tpu.memory_space<vmem>>, vector<1x2x8xf32>
    tpu.vector_store %arg7[%c0_52, %c0_53, %c0_54], %47 {strides = array<i32>} : memref<1x2x8xf32, #tpu.memory_space<vmem>>, vector<1x2x8xf32>,
    %49 = tpu.transpose %40, [1, 0] : vector<256x8xf32> -> vector<8x256xf32>
    %50 = vector.shape_cast %49 : vector<8x256xf32> to vector<1x8x256xf32>
    %c0_55 = arith.constant 0 : index
    %c0_56 = arith.constant 0 : index
    %c0_57 = arith.constant 0 : index
    %51 = vector.load %arg6[%c0_55, %c0_56, %c0_57] : memref<1x8x256xf32, #tpu.memory_space<vmem>>, vector<1x8x256xf32>
    tpu.vector_store %arg6[%c0_55, %c0_56, %c0_57], %50 {strides = array<i32>} : memref<1x8x256xf32, #tpu.memory_space<vmem>>, vector<1x8x256xf32>,
    return
  }
  func.func @transform_0(%arg0: i32) -> (i32, i32, i32) {
    %c0_i32 = arith.constant 0 : i32
    %c0_i32_0 = arith.constant 0 : i32
    %c0_i32_1 = arith.constant 0 : i32
    return %arg0, %c0_i32, %c0_i32_0 : i32, i32, i32
  }
  func.func @transform_1(%arg0: i32) -> (i32, i32) {
    %c0_i32 = arith.constant 0 : i32
    %c0_i32_0 = arith.constant 0 : i32
    %c0_i32_1 = arith.constant 0 : i32
    return %c0_i32, %c0_i32_0 : i32, i32
  }
  func.func @transform_2(%arg0: i32) -> (i32, i32) {
    %c0_i32 = arith.constant 0 : i32
    %c0_i32_0 = arith.constant 0 : i32
    %c0_i32_1 = arith.constant 0 : i32
    return %c0_i32, %c0_i32_0 : i32, i32
  }
  func.func @transform_3(%arg0: i32) -> (i32, i32) {
    %c0_i32 = arith.constant 0 : i32
    %c0_i32_0 = arith.constant 0 : i32
    %c0_i32_1 = arith.constant 0 : i32
    return %c0_i32, %c0_i32_0 : i32, i32
  }
  func.func @transform_4(%arg0: i32) -> (i32, i32) {
    %c0_i32 = arith.constant 0 : i32
    %c0_i32_0 = arith.constant 0 : i32
    %c0_i32_1 = arith.constant 0 : i32
    return %c0_i32, %c0_i32_0 : i32, i32
  }
  func.func @transform_5(%arg0: i32) -> (i32, i32, i32) {
    %c0_i32 = arith.constant 0 : i32
    %c0_i32_0 = arith.constant 0 : i32
    %c0_i32_1 = arith.constant 0 : i32
    return %arg0, %c0_i32, %c0_i32_0 : i32, i32, i32
  }
  func.func @transform_6(%arg0: i32) -> (i32, i32, i32) {
    %c0_i32 = arith.constant 0 : i32
    %c0_i32_0 = arith.constant 0 : i32
    %c0_i32_1 = arith.constant 0 : i32
    return %arg0, %c0_i32, %c0_i32_0 : i32, i32, i32
  }
}

</mosaic_0001>

<llo_original>
// kernel: tpu_custom_call.1
$region0: #{tpu_custom_call.1}
  #allocation0 [shape = 'u32[]', space=smem, size = 0x4, offset = 0x4, fixed_abs, tag = 'smem constant byte address 0x4 - core index']
  #allocation1 [shape = 'u32[144,128]{1,0:T(1,128)}', space=vmem, size = 0x12000, scoped, tag = 'internal scratch']
  #allocation2 [shape = 'f32[20,20,8]{2,1,0:T(8,128)}', space=vmem, size = 0x3c000, scoped, tag = 'scratch operand']
  #allocation3 [shape = 'f32[256,72]{1,0:T(8,128)}', space=vmem, size = 0x20000, scoped, tag = 'scratch operand']
  %s0 = inlined_call_operand.vmem [shape: f32[2,8,256], index: 0, kind: input, shape index: {}]
  %s1 = inlined_call_operand.vmem [shape: bf16[72,8], index: 1, kind: input, shape index: {}]
  %s2 = inlined_call_operand.vmem [shape: f32[1,8], index: 2, kind: input, shape index: {}]
  %s3 = inlined_call_operand.vmem [shape: f32[8,1], index: 3, kind: input, shape index: {}]
  %s4 = inlined_call_operand.vmem [shape: f32[8,1], index: 4, kind: input, shape index: {}]
  %s5 = inlined_call_operand.hbm [shape: f32[2,8,256], index: 5, kind: output, shape index: {0}]
  %s6 = inlined_call_operand.hbm [shape: f32[2,2,8], index: 6, kind: output, shape index: {1}]
  %7 = xla_tuple %s5, %s6
  %s8 = sld [smem:[#allocation0]]
  $region61: #{tpu_custom_call.1} parent=0
    _
  %s10 = ssub.s32 1, %s8
  %s11 = scalar_select 0, %s10, %s8
  $region1: #{tpu_custom_call.1} parent=0
    #allocation4 [shape = 'u8[16384]{0}', space=vmem, size = 0x4000, scoped, tag = 'output window, operand 0']
    #allocation5 [shape = 's32[2]{0}', space=sflag, size = 0x8, scoped, tag = 'scoped memory for tpu_custom_call.1']
    #allocation6 [shape = 'u8[2048]{0}', space=vmem, size = 0x800, scoped, tag = 'output window, operand 1']
    #allocation7 [shape = 's32[2]{0}', space=sflag, size = 0x8, scoped, tag = 'scoped memory for tpu_custom_call.1']
    %12 = vsyncpa [#allocation5], 0
    %s13 = scalar_lea.sflag [#allocation5], 1
    %14 = vsyncpa %s13, 0
    %15 = vsyncpa [#allocation7], 0
    %s16 = scalar_lea.sflag [#allocation7], 1
    %17 = vsyncpa %s16, 0
    loop: start=0, step=1, limit=4
    $region2: #{tpu_custom_call.1} parent=1 // loop_pre_header
      _
    $region3: #{tpu_custom_call.1} parent=1 // loop_header
      %s19 = sphi 0, %s23
      %p20 = scmp.ge.s32.totalorder %s19, 4
      %s29 = sphi 0, %s31
      %s32 = sphi 0, %s29
      %s33 = sphi 0, %s32
      %s49 = sphi 0, %s33
      %s53 = sphi 0, %s53
      %s55 = sphi 0, %s53
      %s56 = sphi 0, %s55
      %s70 = sphi 0, %s56
      %s74 = sphi 0, %s74
      %s76 = sphi 0, %s74
      %s77 = sphi 0, %s76
      %s91 = sphi 0, %s77
      %s95 = sphi 0, %s95
      %s97 = sphi 0, %s95
      %s98 = sphi 0, %s97
      %s112 = sphi 0, %s98
      %s116 = sphi 0, %s116
      %s118 = sphi 0, %s116
      %s119 = sphi 0, %s118
      %s133 = sphi 0, %s119
      %s139 = sphi 0, %s141
      %s142 = sphi 0, %s139
      %s143 = sphi 0, %s142
      %s159 = sphi 0, %s143
      %s165 = sphi 0, %s167
      %s168 = sphi 0, %s165
      %s169 = sphi 0, %s168
      %s185 = sphi 0, %s169
    $region4: #{tpu_custom_call.1} parent=1 // loop_header_branch
      %22 = sbr.rel (%p20) target = $region8
    $region5: #{tpu_custom_call.1} parent=1 // loop_body
      %s24 = ssub.s32 %s19, 1
      %s25 = ssub.s32 %s19, 2
      %s26 = sadd.s32 %s19, 1
      %s27 = ssub.s32 %s19, %s26
      %p28 = scmp.eq.s32.totalorder %s27, 0
      %s30 = sadd.s32 %s29, 1
      %s31 = scalar_select %p28, %s29, %s30
      %p34 = pneg %p28
      %p35 = scmp.eq.s32.totalorder %s19, 1
      %p36 = por %p34, %p35
      %p37 = scmp.ne.s32.totalorder %s29, %s32
      %p38 = scmp.eq.s32.totalorder %s19, 0
      %p39 = por %p37, %p38
      %p40 = scmp.ne.s32.totalorder %s29, %s32
      %p41 = scmp.eq.s32.totalorder %s24, 1
      %p42 = por %p40, %p41
      %p43 = scmp.ne.s32.totalorder %s32, %s33
      %p44 = scmp.eq.s32.totalorder %s24, 0
      %p45 = por %p43, %p44
      %p46 = scmp.ne.s32.totalorder %s32, %s33
      %p47 = scmp.eq.s32.totalorder %s25, 1
      %p48 = por %p46, %p47
      %p50 = scmp.ne.s32.totalorder %s33, %s49
      %p51 = scmp.eq.s32.totalorder %s25, 0
      %p52 = por %p50, %p51
      %s54 = sadd.s32 %s53, 1
      %p57 = scmp.eq.s32.totalorder %s19, 1
      %p58 = scmp.ne.s32.totalorder %s53, %s55
      %p59 = scmp.eq.s32.totalorder %s19, 0
      %p60 = por %p58, %p59
      %p61 = scmp.ne.s32.totalorder %s53, %s55
      %p62 = scmp.eq.s32.totalorder %s24, 1
      %p63 = por %p61, %p62
      %p64 = scmp.ne.s32.totalorder %s55, %s56
      %p65 = scmp.eq.s32.totalorder %s24, 0
      %p66 = por %p64, %p65
      %p67 = scmp.ne.s32.totalorder %s55, %s56
      %p68 = scmp.eq.s32.totalorder %s25, 1
      %p69 = por %p67, %p68
      %p71 = scmp.ne.s32.totalorder %s56, %s70
      %p72 = scmp.eq.s32.totalorder %s25, 0
      %p73 = por %p71, %p72
      %s75 = sadd.s32 %s74, 1
      %p78 = scmp.eq.s32.totalorder %s19, 1
      %p79 = scmp.ne.s32.totalorder %s74, %s76
      %p80 = scmp.eq.s32.totalorder %s19, 0
      %p81 = por %p79, %p80
      %p82 = scmp.ne.s32.totalorder %s74, %s76
      %p83 = scmp.eq.s32.totalorder %s24, 1
      %p84 = por %p82, %p83
      %p85 = scmp.ne.s32.totalorder %s76, %s77
      %p86 = scmp.eq.s32.totalorder %s24, 0
      %p87 = por %p85, %p86
      %p88 = scmp.ne.s32.totalorder %s76, %s77
      %p89 = scmp.eq.s32.totalorder %s25, 1
      %p90 = por %p88, %p89
      %p92 = scmp.ne.s32.totalorder %s77, %s91
      %p93 = scmp.eq.s32.totalorder %s25, 0
      %p94 = por %p92, %p93
      %s96 = sadd.s32 %s95, 1
      %p99 = scmp.eq.s32.totalorder %s19, 1
      %p100 = scmp.ne.s32.totalorder %s95, %s97
      %p101 = scmp.eq.s32.totalorder %s19, 0
      %p102 = por %p100, %p101
      %p103 = scmp.ne.s32.totalorder %s95, %s97
      %p104 = scmp.eq.s32.totalorder %s24, 1
      %p105 = por %p103, %p104
      %p106 = scmp.ne.s32.totalorder %s97, %s98
      %p107 = scmp.eq.s32.totalorder %s24, 0
      %p108 = por %p106, %p107
      %p109 = scmp.ne.s32.totalorder %s97, %s98
      %p110 = scmp.eq.s32.totalorder %s25, 1
      %p111 = por %p109, %p110
      %p113 = scmp.ne.s32.totalorder %s98, %s112
      %p114 = scmp.eq.s32.totalorder %s25, 0
      %p115 = por %p113, %p114
      %s117 = sadd.s32 %s116, 1
      %p120 = scmp.eq.s32.totalorder %s19, 1
      %p121 = scmp.ne.s32.totalorder %s116, %s118
      %p122 = scmp.eq.s32.totalorder %s19, 0
      %p123 = por %p121, %p122
      %p124 = scmp.ne.s32.totalorder %s116, %s118
      %p125 = scmp.eq.s32.totalorder %s24, 1
      %p126 = por %p124, %p125
      %p127 = scmp.ne.s32.totalorder %s118, %s119
      %p128 = scmp.eq.s32.totalorder %s24, 0
      %p129 = por %p127, %p128
      %p130 = scmp.ne.s32.totalorder %s118, %s119
      %p131 = scmp.eq.s32.totalorder %s25, 1
      %p132 = por %p130, %p131
      %p134 = scmp.ne.s32.totalorder %s119, %s133
      %p135 = scmp.eq.s32.totalorder %s25, 0
      %p136 = por %p134, %p135
      %s137 = ssub.s32 %s19, %s26
      %p138 = scmp.eq.s32.totalorder %s137, 0
      %s140 = sadd.s32 %s139, 1
      %s141 = scalar_select %p138, %s139, %s140
      %p144 = pneg %p138
      %p145 = scmp.eq.s32.totalorder %s19, 1
      %p146 = por %p144, %p145
      %p147 = scmp.ne.s32.totalorder %s139, %s142
      %p148 = scmp.eq.s32.totalorder %s19, 0
      %p149 = por %p147, %p148
      %p150 = scmp.ne.s32.totalorder %s139, %s142
      %p151 = scmp.eq.s32.totalorder %s24, 1
      %p152 = por %p150, %p151
      %p153 = scmp.ne.s32.totalorder %s142, %s143
      %p154 = scmp.eq.s32.totalorder %s24, 0
      %p155 = por %p153, %p154
      %p156 = scmp.ne.s32.totalorder %s142, %s143
      %p157 = scmp.eq.s32.totalorder %s25, 1
      %p158 = por %p156, %p157
      %p160 = scmp.ne.s32.totalorder %s143, %s159
      %p161 = scmp.eq.s32.totalorder %s25, 0
      %p162 = por %p160, %p161
      %s163 = ssub.s32 %s19, %s26
      %p164 = scmp.eq.s32.totalorder %s163, 0
      %s166 = sadd.s32 %s165, 1
      %s167 = scalar_select %p164, %s165, %s166
      %p170 = pneg %p164
      %p171 = scmp.eq.s32.totalorder %s19, 1
      %p172 = por %p170, %p171
      %p173 = scmp.ne.s32.totalorder %s165, %s168
      %p174 = scmp.eq.s32.totalorder %s19, 0
      %p175 = por %p173, %p174
      %p176 = scmp.ne.s32.totalorder %s165, %s168
      %p177 = scmp.eq.s32.totalorder %s24, 1
      %p178 = por %p176, %p177
      %p179 = scmp.ne.s32.totalorder %s168, %s169
      %p180 = scmp.eq.s32.totalorder %s24, 0
      %p181 = por %p179, %p180
      %p182 = scmp.ne.s32.totalorder %s168, %s169
      %p183 = scmp.eq.s32.totalorder %s25, 1
      %p184 = por %p182, %p183
      %p186 = scmp.ne.s32.totalorder %s169, %s185
      %p187 = scmp.eq.s32.totalorder %s25, 0
      %p188 = por %p186, %p187
      %p189 = scmp.le.s32.totalorder 1, %s19
      %p190 = scmp.lt.s32.totalorder %s19, 3
      %p191 = pnand %p189, %p190
      %p192 = pneg %p191
      // Predicated region
      $region9: #{tpu_custom_call.1} parent=5 // pred_check
        _
      $region10: #{tpu_custom_call.1} parent=5 // pred_check_branch
        %194 = sbr.rel (%p191) target = $region12
      $region11: #{tpu_custom_call.1} parent=5 // pred_region
        %s195 = ssub.s32 %s19, 1
        // Predicated region
        $region13: #{tpu_custom_call.1} parent=11 // pred_check
          %p196 = pneg %p66
        $region14: #{tpu_custom_call.1} parent=11 // pred_check_branch
          %198 = sbr.rel (%p196) target = $region16
        $region15: #{tpu_custom_call.1} parent=11 // pred_region
          _
        $region16: #{tpu_custom_call.1} parent=11 // pred_fallthru
          _
        // Predicated region
        $region17: #{tpu_custom_call.1} parent=11 // pred_check
          %p199 = pneg %p87
        $region18: #{tpu_custom_call.1} parent=11 // pred_check_branch
          %201 = sbr.rel (%p199) target = $region20
        $region19: #{tpu_custom_call.1} parent=11 // pred_region
          _
        $region20: #{tpu_custom_call.1} parent=11 // pred_fallthru
          _
        // Predicated region
        $region21: #{tpu_custom_call.1} parent=11 // pred_check
          %p202 = pneg %p108
        $region22: #{tpu_custom_call.1} parent=11 // pred_check_branch
          %204 = sbr.rel (%p202) target = $region24
        $region23: #{tpu_custom_call.1} parent=11 // pred_region
          _
        $region24: #{tpu_custom_call.1} parent=11 // pred_fallthru
          _
        // Predicated region
        $region25: #{tpu_custom_call.1} parent=11 // pred_check
          %p205 = pneg %p129
        $region26: #{tpu_custom_call.1} parent=11 // pred_check_branch
          %207 = sbr.rel (%p205) target = $region28
        $region27: #{tpu_custom_call.1} parent=11 // pred_region
          _
        $region28: #{tpu_custom_call.1} parent=11 // pred_fallthru
          _
      $region12: #{tpu_custom_call.1} parent=5 // pred_fallthru
        _
      %p208 = scmp.lt.s32.totalorder %s19, 2
      // Predicated region
      $region29: #{tpu_custom_call.1} parent=5 // pred_check
        %p209 = pneg %p208
      $region30: #{tpu_custom_call.1} parent=5 // pred_check_branch
        %211 = sbr.rel (%p209) target = $region32
      $region31: #{tpu_custom_call.1} parent=5 // pred_region
        // Predicated region
        $region33: #{tpu_custom_call.1} parent=31 // pred_check
          %p212 = pneg %p39
        $region34: #{tpu_custom_call.1} parent=31 // pred_check_branch
          %214 = sbr.rel (%p212) target = $region36
        $region35: #{tpu_custom_call.1} parent=31 // pred_region
          %p215 = scmp.lt.s32.totalorder %s19, 1
          %s216 = scalar_select %p215, %s19, 1
          %s217 = smul.addr %s216, 2
          %s218 = smul.addr %s217, 8
          %s219 = scalar_lea.vmem %s0, %s218
        $region36: #{tpu_custom_call.1} parent=31 // pred_fallthru
          _
      $region32: #{tpu_custom_call.1} parent=5 // pred_fallthru
        _
      %p220 = scmp.le.s32.totalorder 1, %s19
      %p221 = scmp.lt.s32.totalorder %s19, 3
      %p222 = pnand %p220, %p221
      %p223 = pneg %p222
      // Predicated region
      $region37: #{tpu_custom_call.1} parent=5 // pred_check
        _
      $region38: #{tpu_custom_call.1} parent=5 // pred_check_branch
        %225 = sbr.rel (%p222) target = $region40
      $region39: #{tpu_custom_call.1} parent=5 // pred_region
        %s226 = ssub.s32 %s19, 1
        %p227 = scmp.lt.s32.totalorder %s24, 1
        %s228 = scalar_select %p227, %s24, 1
        %s229 = smul.addr %s228, 2
        %s230 = smul.addr %s229, 8
        %s231 = scalar_lea.vmem %s0, %s230
        %p232 = pneg %p45
        %p233 = pneg %p42
        %p234 = pneg %p66
        %p235 = pneg %p63
        %p236 = pneg %p87
        %p237 = pneg %p84
        %p238 = pneg %p108
        %p239 = pneg %p105
        %p240 = pneg %p129
        %p241 = pneg %p126
        %p242 = pneg %p155
        %p243 = pneg %p152
        %s244 = sand.u32 %s142, 1
        %s245 = scalar_lea.sflag [#allocation5], %s244
        %s246 = sand.u32 %s142, 1
        %s247 = smul.addr %s246, 16
        %s248 = scalar_lea.vmem [#allocation4], %s247
        %p249 = pneg %p181
        %p250 = pneg %p178
        %s251 = sand.u32 %s168, 1
        %s252 = scalar_lea.sflag [#allocation7], %s251
        %s253 = sand.u32 %s168, 1
        %s254 = smul.addr %s253, 2
        %s255 = scalar_lea.vmem [#allocation6], %s254
        %p256 = scmp.lt.s32.totalorder %s24, 1
        %s257 = scalar_select %p256, %s24, 1
        %s258 = smul.addr %s257, 2
        %s259 = smul.addr %s258, 8
        %s260 = scalar_lea.vmem %s0, %s259
        %v262 = vld [vmem:[%s260] sm:$0xff]
        %v263 = vld [vmem:[%s260 + $0x8] sm:$0xff]
        %vm264 = vcmask 64512
        %265 = vst.msk [vmem:[#allocation2] sm:$0xff] %vm264, 0.0
        %266 = vst.msk [vmem:[#allocation2 + $0x8] sm:$0xff] %vm264, 0.0
        %vm267 = vcmask 60416
        %268 = vst.msk [vmem:[#allocation2 + $0x10] sm:$0xf] %vm267, 0.0
        %269 = vst.msk [vmem:[#allocation2 + $0x18] sm:$0xff] %vm264, 0.0
        %270 = vst.msk [vmem:[#allocation2 + $0x20] sm:$0xff] %vm264, 0.0
        %271 = vst.msk [vmem:[#allocation2 + $0x28] sm:$0xf] %vm267, 0.0
        %272 = vst.msk [vmem:[#allocation2 + $0x30] sm:$0xff] %vm264, 0.0
        %273 = vst.msk [vmem:[#allocation2 + $0x38] sm:$0xff] %vm264, 0.0
        %274 = vst.msk [vmem:[#allocation2 + $0x40] sm:$0xf] %vm267, 0.0
        %275 = vst.msk [vmem:[#allocation2 + $0x48] sm:$0xff] %vm264, 0.0
        %276 = vst.msk [vmem:[#allocation2 + $0x50] sm:$0xff] %vm264, 0.0
        %277 = vst.msk [vmem:[#allocation2 + $0x58] sm:$0xf] %vm267, 0.0
        %278 = vst.msk [vmem:[#allocation2 + $0x60] sm:$0xff] %vm264, 0.0
        %279 = vst.msk [vmem:[#allocation2 + $0x68] sm:$0xff] %vm264, 0.0
        %280 = vst.msk [vmem:[#allocation2 + $0x70] sm:$0xf] %vm267, 0.0
        %281 = vst.msk [vmem:[#allocation2 + $0x78] sm:$0xff] %vm264, 0.0
        %282 = vst.msk [vmem:[#allocation2 + $0x80] sm:$0xff] %vm264, 0.0
        %283 = vst.msk [vmem:[#allocation2 + $0x88] sm:$0xf] %vm267, 0.0
        %284 = vst.msk [vmem:[#allocation2 + $0x90] sm:$0xff] %vm264, 0.0
        %285 = vst.msk [vmem:[#allocation2 + $0x98] sm:$0xff] %vm264, 0.0
        %286 = vst.msk [vmem:[#allocation2 + $0xa0] sm:$0xf] %vm267, 0.0
        %287 = vst.msk [vmem:[#allocation2 + $0xa8] sm:$0xff] %vm264, 0.0
        %288 = vst.msk [vmem:[#allocation2 + $0xb0] sm:$0xff] %vm264, 0.0
        %289 = vst.msk [vmem:[#allocation2 + $0xb8] sm:$0xf] %vm267, 0.0
        %290 = vst.msk [vmem:[#allocation2 + $0xc0] sm:$0xff] %vm264, 0.0
        %291 = vst.msk [vmem:[#allocation2 + $0xc8] sm:$0xff] %vm264, 0.0
        %292 = vst.msk [vmem:[#allocation2 + $0xd0] sm:$0xf] %vm267, 0.0
        %293 = vst.msk [vmem:[#allocation2 + $0xd8] sm:$0xff] %vm264, 0.0
        %294 = vst.msk [vmem:[#allocation2 + $0xe0] sm:$0xff] %vm264, 0.0
        %295 = vst.msk [vmem:[#allocation2 + $0xe8] sm:$0xf] %vm267, 0.0
        %296 = vst.msk [vmem:[#allocation2 + $0xf0] sm:$0xff] %vm264, 0.0
        %297 = vst.msk [vmem:[#allocation2 + $0xf8] sm:$0xff] %vm264, 0.0
        %298 = vst.msk [vmem:[#allocation2 + $0x100] sm:$0xf] %vm267, 0.0
        %299 = vst.msk [vmem:[#allocation2 + $0x108] sm:$0xff] %vm264, 0.0
        %300 = vst.msk [vmem:[#allocation2 + $0x110] sm:$0xff] %vm264, 0.0
        %301 = vst.msk [vmem:[#allocation2 + $0x118] sm:$0xf] %vm267, 0.0
        %302 = vst.msk [vmem:[#allocation2 + $0x120] sm:$0xff] %vm264, 0.0
        %303 = vst.msk [vmem:[#allocation2 + $0x128] sm:$0xff] %vm264, 0.0
        %304 = vst.msk [vmem:[#allocation2 + $0x130] sm:$0xf] %vm267, 0.0
        %305 = vst.msk [vmem:[#allocation2 + $0x138] sm:$0xff] %vm264, 0.0
        %306 = vst.msk [vmem:[#allocation2 + $0x140] sm:$0xff] %vm264, 0.0
        %307 = vst.msk [vmem:[#allocation2 + $0x148] sm:$0xf] %vm267, 0.0
        %308 = vst.msk [vmem:[#allocation2 + $0x150] sm:$0xff] %vm264, 0.0
        %309 = vst.msk [vmem:[#allocation2 + $0x158] sm:$0xff] %vm264, 0.0
        %310 = vst.msk [vmem:[#allocation2 + $0x160] sm:$0xf] %vm267, 0.0
        %311 = vst.msk [vmem:[#allocation2 + $0x168] sm:$0xff] %vm264, 0.0
        %312 = vst.msk [vmem:[#allocation2 + $0x170] sm:$0xff] %vm264, 0.0
        %313 = vst.msk [vmem:[#allocation2 + $0x178] sm:$0xf] %vm267, 0.0
        %314 = vst.msk [vmem:[#allocation2 + $0x180] sm:$0xff] %vm264, 0.0
        %315 = vst.msk [vmem:[#allocation2 + $0x188] sm:$0xff] %vm264, 0.0
        %316 = vst.msk [vmem:[#allocation2 + $0x190] sm:$0xf] %vm267, 0.0
        %317 = vst.msk [vmem:[#allocation2 + $0x198] sm:$0xff] %vm264, 0.0
        %318 = vst.msk [vmem:[#allocation2 + $0x1a0] sm:$0xff] %vm264, 0.0
        %319 = vst.msk [vmem:[#allocation2 + $0x1a8] sm:$0xf] %vm267, 0.0
        %320 = vst.msk [vmem:[#allocation2 + $0x1b0] sm:$0xff] %vm264, 0.0
        %321 = vst.msk [vmem:[#allocation2 + $0x1b8] sm:$0xff] %vm264, 0.0
        %322 = vst.msk [vmem:[#allocation2 + $0x1c0] sm:$0xf] %vm267, 0.0
        %323 = vst.msk [vmem:[#allocation2 + $0x1c8] sm:$0xff] %vm264, 0.0
        %324 = vst.msk [vmem:[#allocation2 + $0x1d0] sm:$0xff] %vm264, 0.0
        %325 = vst.msk [vmem:[#allocation2 + $0x1d8] sm:$0xf] %vm267, 0.0
        %326 = vxpose.xlu0.b32.start [1/16] %v262, 128
        %327 = vxpose.xlu0.b32.cont [2/16] 0.0, 128
        %328 = vxpose.xlu0.b32.cont [3/16] 0.0, 128
        %329 = vxpose.xlu0.b32.cont [4/16] 0.0, 128
        %330 = vxpose.xlu0.b32.cont [5/16] 0.0, 128
        %331 = vxpose.xlu0.b32.cont [6/16] 0.0, 128
        %332 = vxpose.xlu0.b32.cont [7/16] 0.0, 128
        %333 = vxpose.xlu0.b32.cont [8/16] 0.0, 128
        %334 = vxpose.xlu0.b32.cont [9/16] 0.0, 128
        %335 = vxpose.xlu0.b32.cont [10/16] 0.0, 128
        %336 = vxpose.xlu0.b32.cont [11/16] 0.0, 128
        %337 = vxpose.xlu0.b32.cont [12/16] 0.0, 128
        %338 = vxpose.xlu0.b32.cont [13/16] 0.0, 128
        %339 = vxpose.xlu0.b32.cont [14/16] 0.0, 128
        %340 = vxpose.xlu0.b32.cont [15/16] 0.0, 128
        %341 = vxpose.xlu0.b32.end [16/16] 0.0, 128
        %v342 = vpop.trf.xlu0
        %v343 = vpop.trf.xlu0
        %v344 = vpop.trf.xlu0
        %v345 = vpop.trf.xlu0
        %v346 = vpop.trf.xlu0
        %v347 = vpop.trf.xlu0
        %v348 = vpop.trf.xlu0
        %v349 = vpop.trf.xlu0
        %v350 = vpop.trf.xlu0
        %v351 = vpop.trf.xlu0
        %v352 = vpop.trf.xlu0
        %v353 = vpop.trf.xlu0
        %v354 = vpop.trf.xlu0
        %v355 = vpop.trf.xlu0
        %v356 = vpop.trf.xlu0
        %v357 = vpop.trf.xlu0
        %358 = vxpose.xlu0.b32.start [1/16] %v263, 128
        %359 = vxpose.xlu0.b32.cont [2/16] 0.0, 128
        %360 = vxpose.xlu0.b32.cont [3/16] 0.0, 128
        %361 = vxpose.xlu0.b32.cont [4/16] 0.0, 128
        %362 = vxpose.xlu0.b32.cont [5/16] 0.0, 128
        %363 = vxpose.xlu0.b32.cont [6/16] 0.0, 128
        %364 = vxpose.xlu0.b32.cont [7/16] 0.0, 128
        %365 = vxpose.xlu0.b32.cont [8/16] 0.0, 128
        %366 = vxpose.xlu0.b32.cont [9/16] 0.0, 128
        %367 = vxpose.xlu0.b32.cont [10/16] 0.0, 128
        %368 = vxpose.xlu0.b32.cont [11/16] 0.0, 128
        %369 = vxpose.xlu0.b32.cont [12/16] 0.0, 128
        %370 = vxpose.xlu0.b32.cont [13/16] 0.0, 128
        %371 = vxpose.xlu0.b32.cont [14/16] 0.0, 128
        %372 = vxpose.xlu0.b32.cont [15/16] 0.0, 128
        %373 = vxpose.xlu0.b32.end [16/16] 0.0, 128
        %v374 = vpop.trf.xlu0
        %v375 = vpop.trf.xlu0
        %v376 = vpop.trf.xlu0
        %v377 = vpop.trf.xlu0
        %v378 = vpop.trf.xlu0
        %v379 = vpop.trf.xlu0
        %v380 = vpop.trf.xlu0
        %v381 = vpop.trf.xlu0
        %v382 = vpop.trf.xlu0
        %v383 = vpop.trf.xlu0
        %v384 = vpop.trf.xlu0
        %v385 = vpop.trf.xlu0
        %v386 = vpop.trf.xlu0
        %v387 = vpop.trf.xlu0
        %v388 = vpop.trf.xlu0
        %v389 = vpop.trf.xlu0
        %s390 = scalar_lea.vmem [#allocation2], 48
        %391 = vst.msk [vmem:[%s390 + $0x2] sm:$0xff] %vm264, %v342
        %392 = vst.msk [vmem:[%s390 + $0xa] sm:$0xff] %vm264, %v343
        %393 = vst.msk [vmem:[%s390 + $0x1a] sm:$0xff] %vm264, %v344
        %394 = vst.msk [vmem:[%s390 + $0x22] sm:$0xff] %vm264, %v345
        %395 = vst.msk [vmem:[%s390 + $0x32] sm:$0xff] %vm264, %v346
        %396 = vst.msk [vmem:[%s390 + $0x3a] sm:$0xff] %vm264, %v347
        %397 = vst.msk [vmem:[%s390 + $0x4a] sm:$0xff] %vm264, %v348
        %398 = vst.msk [vmem:[%s390 + $0x52] sm:$0xff] %vm264, %v349
        %399 = vst.msk [vmem:[%s390 + $0x62] sm:$0xff] %vm264, %v350
        %400 = vst.msk [vmem:[%s390 + $0x6a] sm:$0xff] %vm264, %v351
        %401 = vst.msk [vmem:[%s390 + $0x7a] sm:$0xff] %vm264, %v352
        %402 = vst.msk [vmem:[%s390 + $0x82] sm:$0xff] %vm264, %v353
        %403 = vst.msk [vmem:[%s390 + $0x92] sm:$0xff] %vm264, %v354
        %404 = vst.msk [vmem:[%s390 + $0x9a] sm:$0xff] %vm264, %v355
        %405 = vst.msk [vmem:[%s390 + $0xaa] sm:$0xff] %vm264, %v356
        %406 = vst.msk [vmem:[%s390 + $0xb2] sm:$0xff] %vm264, %v357
        %407 = vst.msk [vmem:[%s390 + $0xc2] sm:$0xff] %vm264, %v374
        %408 = vst.msk [vmem:[%s390 + $0xca] sm:$0xff] %vm264, %v375
        %409 = vst.msk [vmem:[%s390 + $0xda] sm:$0xff] %vm264, %v376
        %410 = vst.msk [vmem:[%s390 + $0xe2] sm:$0xff] %vm264, %v377
        %411 = vst.msk [vmem:[%s390 + $0xf2] sm:$0xff] %vm264, %v378
        %412 = vst.msk [vmem:[%s390 + $0xfa] sm:$0xff] %vm264, %v379
        %413 = vst.msk [vmem:[%s390 + $0x10a] sm:$0xff] %vm264, %v380
        %414 = vst.msk [vmem:[%s390 + $0x112] sm:$0xff] %vm264, %v381
        %415 = vst.msk [vmem:[%s390 + $0x122] sm:$0xff] %vm264, %v382
        %416 = vst.msk [vmem:[%s390 + $0x12a] sm:$0xff] %vm264, %v383
        %417 = vst.msk [vmem:[%s390 + $0x13a] sm:$0xff] %vm264, %v384
        %418 = vst.msk [vmem:[%s390 + $0x142] sm:$0xff] %vm264, %v385
        %419 = vst.msk [vmem:[%s390 + $0x152] sm:$0xff] %vm264, %v386
        %420 = vst.msk [vmem:[%s390 + $0x15a] sm:$0xff] %vm264, %v387
        %421 = vst.msk [vmem:[%s390 + $0x16a] sm:$0xff] %vm264, %v388
        %422 = vst.msk [vmem:[%s390 + $0x172] sm:$0xff] %vm264, %v389
        %v423 = vld [vmem:[#allocation2] sm:$0xff]
        %v424 = vld [vmem:[#allocation2 + $0x8] sm:$0xff]
        %v425 = vld [vmem:[#allocation2 + $0x18] sm:$0xff]
        %v426 = vld [vmem:[#allocation2 + $0x20] sm:$0xff]
        %v427 = vld [vmem:[#allocation2 + $0x30] sm:$0xff]
        %v428 = vld [vmem:[#allocation2 + $0x38] sm:$0xff]
        %v429 = vld [vmem:[#allocation2 + $0x48] sm:$0xff]
        %v430 = vld [vmem:[#allocation2 + $0x50] sm:$0xff]
        %v431 = vld [vmem:[#allocation2 + $0x60] sm:$0xff]
        %v432 = vld [vmem:[#allocation2 + $0x68] sm:$0xff]
        %v433 = vld [vmem:[#allocation2 + $0x78] sm:$0xff]
        %v434 = vld [vmem:[#allocation2 + $0x80] sm:$0xff]
        %v435 = vld [vmem:[#allocation2 + $0x90] sm:$0xff]
        %v436 = vld [vmem:[#allocation2 + $0x98] sm:$0xff]
        %v437 = vld [vmem:[#allocation2 + $0xa8] sm:$0xff]
        %v438 = vld [vmem:[#allocation2 + $0xb0] sm:$0xff]
        %v439 = vld [vmem:[#allocation2 + $0xc0] sm:$0xff]
        %v440 = vld [vmem:[#allocation2 + $0xc8] sm:$0xff]
        %v441 = vld [vmem:[#allocation2 + $0xd8] sm:$0xff]
        %v442 = vld [vmem:[#allocation2 + $0xe0] sm:$0xff]
        %v443 = vld [vmem:[#allocation2 + $0xf0] sm:$0xff]
        %v444 = vld [vmem:[#allocation2 + $0xf8] sm:$0xff]
        %v445 = vld [vmem:[#allocation2 + $0x108] sm:$0xff]
        %v446 = vld [vmem:[#allocation2 + $0x110] sm:$0xff]
        %v447 = vld [vmem:[#allocation2 + $0x120] sm:$0xff]
        %v448 = vld [vmem:[#allocation2 + $0x128] sm:$0xff]
        %v449 = vld [vmem:[#allocation2 + $0x138] sm:$0xff]
        %v450 = vld [vmem:[#allocation2 + $0x140] sm:$0xff]
        %v451 = vld [vmem:[#allocation2 + $0x150] sm:$0xff]
        %v452 = vld [vmem:[#allocation2 + $0x158] sm:$0xff]
        %v453 = vld [vmem:[#allocation2 + $0x168] sm:$0xff]
        %v454 = vld [vmem:[#allocation2 + $0x170] sm:$0xff]
        %455 = vst.msk [vmem:[#allocation3] sm:$0xff] %vm264, %v423
        %456 = vst.msk [vmem:[#allocation3 + $0x8] sm:$0xff] %vm264, %v424
        %457 = vst.msk [vmem:[#allocation3 + $0x10] sm:$0xff] %vm264, %v425
        %458 = vst.msk [vmem:[#allocation3 + $0x18] sm:$0xff] %vm264, %v426
        %459 = vst.msk [vmem:[#allocation3 + $0x20] sm:$0xff] %vm264, %v427
        %460 = vst.msk [vmem:[#allocation3 + $0x28] sm:$0xff] %vm264, %v428
        %461 = vst.msk [vmem:[#allocation3 + $0x30] sm:$0xff] %vm264, %v429
        %462 = vst.msk [vmem:[#allocation3 + $0x38] sm:$0xff] %vm264, %v430
        %463 = vst.msk [vmem:[#allocation3 + $0x40] sm:$0xff] %vm264, %v431
        %464 = vst.msk [vmem:[#allocation3 + $0x48] sm:$0xff] %vm264, %v432
        %465 = vst.msk [vmem:[#allocation3 + $0x50] sm:$0xff] %vm264, %v433
        %466 = vst.msk [vmem:[#allocation3 + $0x58] sm:$0xff] %vm264, %v434
        %467 = vst.msk [vmem:[#allocation3 + $0x60] sm:$0xff] %vm264, %v435
        %468 = vst.msk [vmem:[#allocation3 + $0x68] sm:$0xff] %vm264, %v436
        %469 = vst.msk [vmem:[#allocation3 + $0x70] sm:$0xff] %vm264, %v437
        %470 = vst.msk [vmem:[#allocation3 + $0x78] sm:$0xff] %vm264, %v438
        %471 = vst.msk [vmem:[#allocation3 + $0x80] sm:$0xff] %vm264, %v439
        %472 = vst.msk [vmem:[#allocation3 + $0x88] sm:$0xff] %vm264, %v440
        %473 = vst.msk [vmem:[#allocation3 + $0x90] sm:$0xff] %vm264, %v441
        %474 = vst.msk [vmem:[#allocation3 + $0x98] sm:$0xff] %vm264, %v442
        %475 = vst.msk [vmem:[#allocation3 + $0xa0] sm:$0xff] %vm264, %v443
        %476 = vst.msk [vmem:[#allocation3 + $0xa8] sm:$0xff] %vm264, %v444
        %477 = vst.msk [vmem:[#allocation3 + $0xb0] sm:$0xff] %vm264, %v445
        %478 = vst.msk [vmem:[#allocation3 + $0xb8] sm:$0xff] %vm264, %v446
        %479 = vst.msk [vmem:[#allocation3 + $0xc0] sm:$0xff] %vm264, %v447
        %480 = vst.msk [vmem:[#allocation3 + $0xc8] sm:$0xff] %vm264, %v448
        %481 = vst.msk [vmem:[#allocation3 + $0xd0] sm:$0xff] %vm264, %v449
        %482 = vst.msk [vmem:[#allocation3 + $0xd8] sm:$0xff] %vm264, %v450
        %483 = vst.msk [vmem:[#allocation3 + $0xe0] sm:$0xff] %vm264, %v451
        %484 = vst.msk [vmem:[#allocation3 + $0xe8] sm:$0xff] %vm264, %v452
        %485 = vst.msk [vmem:[#allocation3 + $0xf0] sm:$0xff] %vm264, %v453
        %486 = vst.msk [vmem:[#allocation3 + $0xf8] sm:$0xff] %vm264, %v454
        %v487 = vld [vmem:[#allocation2 + $0x2] sm:$0xff]
        %v488 = vld [vmem:[#allocation2 + $0xa] sm:$0xff]
        %v489 = vld [vmem:[#allocation2 + $0x1a] sm:$0xff]
        %v490 = vld [vmem:[#allocation2 + $0x22] sm:$0xff]
        %v491 = vld [vmem:[#allocation2 + $0x32] sm:$0xff]
        %v492 = vld [vmem:[#allocation2 + $0x3a] sm:$0xff]
        %v493 = vld [vmem:[#allocation2 + $0x4a] sm:$0xff]
        %v494 = vld [vmem:[#allocation2 + $0x52] sm:$0xff]
        %v495 = vld [vmem:[#allocation2 + $0x62] sm:$0xff]
        %v496 = vld [vmem:[#allocation2 + $0x6a] sm:$0xff]
        %v497 = vld [vmem:[#allocation2 + $0x7a] sm:$0xff]
        %v498 = vld [vmem:[#allocation2 + $0x82] sm:$0xff]
        %v499 = vld [vmem:[#allocation2 + $0x92] sm:$0xff]
        %v500 = vld [vmem:[#allocation2 + $0x9a] sm:$0xff]
        %v501 = vld [vmem:[#allocation2 + $0xaa] sm:$0xff]
        %v502 = vld [vmem:[#allocation2 + $0xb2] sm:$0xff]
        %v503 = vld [vmem:[#allocation2 + $0xc2] sm:$0xff]
        %v504 = vld [vmem:[#allocation2 + $0xca] sm:$0xff]
        %v505 = vld [vmem:[#allocation2 + $0xda] sm:$0xff]
        %v506 = vld [vmem:[#allocation2 + $0xe2] sm:$0xff]
        %v507 = vld [vmem:[#allocation2 + $0xf2] sm:$0xff]
        %v508 = vld [vmem:[#allocation2 + $0xfa] sm:$0xff]
        %v509 = vld [vmem:[#allocation2 + $0x10a] sm:$0xff]
        %v510 = vld [vmem:[#allocation2 + $0x112] sm:$0xff]
        %v511 = vld [vmem:[#allocation2 + $0x122] sm:$0xff]
        %v512 = vld [vmem:[#allocation2 + $0x12a] sm:$0xff]
        %v513 = vld [vmem:[#allocation2 + $0x13a] sm:$0xff]
        %v514 = vld [vmem:[#allocation2 + $0x142] sm:$0xff]
        %v515 = vld [vmem:[#allocation2 + $0x152] sm:$0xff]
        %v516 = vld [vmem:[#allocation2 + $0x15a] sm:$0xff]
        %v517 = vld [vmem:[#allocation2 + $0x16a] sm:$0xff]
        %v518 = vld [vmem:[#allocation2 + $0x172] sm:$0xff]
        %551 = vrot.lane.b32.xlu0 %v487, 8
        %v552 = vpop.permute.xlu0 %551
        %553 = vrot.lane.b32.xlu0 %v488, 8
        %v554 = vpop.permute.xlu0 %553
        %555 = vrot.lane.b32.xlu0 %v489, 8
        %v556 = vpop.permute.xlu0 %555
        %557 = vrot.lane.b32.xlu0 %v490, 8
        %v558 = vpop.permute.xlu0 %557
        %559 = vrot.lane.b32.xlu0 %v491, 8
        %v560 = vpop.permute.xlu0 %559
        %561 = vrot.lane.b32.xlu0 %v492, 8
        %v562 = vpop.permute.xlu0 %561
        %563 = vrot.lane.b32.xlu0 %v493, 8
        %v564 = vpop.permute.xlu0 %563
        %565 = vrot.lane.b32.xlu0 %v494, 8
        %v566 = vpop.permute.xlu0 %565
        %567 = vrot.lane.b32.xlu0 %v495, 8
        %v568 = vpop.permute.xlu0 %567
        %569 = vrot.lane.b32.xlu0 %v496, 8
        %v570 = vpop.permute.xlu0 %569
        %571 = vrot.lane.b32.xlu0 %v497, 8
        %v572 = vpop.permute.xlu0 %571
        %573 = vrot.lane.b32.xlu0 %v498, 8
        %v574 = vpop.permute.xlu0 %573
        %575 = vrot.lane.b32.xlu0 %v499, 8
        %v576 = vpop.permute.xlu0 %575
        %577 = vrot.lane.b32.xlu0 %v500, 8
        %v578 = vpop.permute.xlu0 %577
        %579 = vrot.lane.b32.xlu0 %v501, 8
        %v580 = vpop.permute.xlu0 %579
        %581 = vrot.lane.b32.xlu0 %v502, 8
        %v582 = vpop.permute.xlu0 %581
        %583 = vrot.lane.b32.xlu0 %v503, 8
        %v584 = vpop.permute.xlu0 %583
        %585 = vrot.lane.b32.xlu0 %v504, 8
        %v586 = vpop.permute.xlu0 %585
        %587 = vrot.lane.b32.xlu0 %v505, 8
        %v588 = vpop.permute.xlu0 %587
        %589 = vrot.lane.b32.xlu0 %v506, 8
        %v590 = vpop.permute.xlu0 %589
        %591 = vrot.lane.b32.xlu0 %v507, 8
        %v592 = vpop.permute.xlu0 %591
        %593 = vrot.lane.b32.xlu0 %v508, 8
        %v594 = vpop.permute.xlu0 %593
        %595 = vrot.lane.b32.xlu0 %v509, 8
        %v596 = vpop.permute.xlu0 %595
        %597 = vrot.lane.b32.xlu0 %v510, 8
        %v598 = vpop.permute.xlu0 %597
        %599 = vrot.lane.b32.xlu0 %v511, 8
        %v600 = vpop.permute.xlu0 %599
        %601 = vrot.lane.b32.xlu0 %v512, 8
        %v602 = vpop.permute.xlu0 %601
        %603 = vrot.lane.b32.xlu0 %v513, 8
        %v604 = vpop.permute.xlu0 %603
        %605 = vrot.lane.b32.xlu0 %v514, 8
        %v606 = vpop.permute.xlu0 %605
        %607 = vrot.lane.b32.xlu0 %v515, 8
        %v608 = vpop.permute.xlu0 %607
        %609 = vrot.lane.b32.xlu0 %v516, 8
        %v610 = vpop.permute.xlu0 %609
        %611 = vrot.lane.b32.xlu0 %v517, 8
        %v612 = vpop.permute.xlu0 %611
        %613 = vrot.lane.b32.xlu0 %v518, 8
        %v614 = vpop.permute.xlu0 %613
        %vm647 = vcmask 130112
        %648 = vst.msk [vmem:[#allocation3] sm:$0xff] %vm647, %v552
        %649 = vst.msk [vmem:[#allocation3 + $0x8] sm:$0xff] %vm647, %v554
        %650 = vst.msk [vmem:[#allocation3 + $0x10] sm:$0xff] %vm647, %v556
        %651 = vst.msk [vmem:[#allocation3 + $0x18] sm:$0xff] %vm647, %v558
        %652 = vst.msk [vmem:[#allocation3 + $0x20] sm:$0xff] %vm647, %v560
        %653 = vst.msk [vmem:[#allocation3 + $0x28] sm:$0xff] %vm647, %v562
        %654 = vst.msk [vmem:[#allocation3 + $0x30] sm:$0xff] %vm647, %v564
        %655 = vst.msk [vmem:[#allocation3 + $0x38] sm:$0xff] %vm647, %v566
        %656 = vst.msk [vmem:[#allocation3 + $0x40] sm:$0xff] %vm647, %v568
        %657 = vst.msk [vmem:[#allocation3 + $0x48] sm:$0xff] %vm647, %v570
        %658 = vst.msk [vmem:[#allocation3 + $0x50] sm:$0xff] %vm647, %v572
        %659 = vst.msk [vmem:[#allocation3 + $0x58] sm:$0xff] %vm647, %v574
        %660 = vst.msk [vmem:[#allocation3 + $0x60] sm:$0xff] %vm647, %v576
        %661 = vst.msk [vmem:[#allocation3 + $0x68] sm:$0xff] %vm647, %v578
        %662 = vst.msk [vmem:[#allocation3 + $0x70] sm:$0xff] %vm647, %v580
        %663 = vst.msk [vmem:[#allocation3 + $0x78] sm:$0xff] %vm647, %v582
        %664 = vst.msk [vmem:[#allocation3 + $0x80] sm:$0xff] %vm647, %v584
        %665 = vst.msk [vmem:[#allocation3 + $0x88] sm:$0xff] %vm647, %v586
        %666 = vst.msk [vmem:[#allocation3 + $0x90] sm:$0xff] %vm647, %v588
        %667 = vst.msk [vmem:[#allocation3 + $0x98] sm:$0xff] %vm647, %v590
        %668 = vst.msk [vmem:[#allocation3 + $0xa0] sm:$0xff] %vm647, %v592
        %669 = vst.msk [vmem:[#allocation3 + $0xa8] sm:$0xff] %vm647, %v594
        %670 = vst.msk [vmem:[#allocation3 + $0xb0] sm:$0xff] %vm647, %v596
        %671 = vst.msk [vmem:[#allocation3 + $0xb8] sm:$0xff] %vm647, %v598
        %672 = vst.msk [vmem:[#allocation3 + $0xc0] sm:$0xff] %vm647, %v600
        %673 = vst.msk [vmem:[#allocation3 + $0xc8] sm:$0xff] %vm647, %v602
        %674 = vst.msk [vmem:[#allocation3 + $0xd0] sm:$0xff] %vm647, %v604
        %675 = vst.msk [vmem:[#allocation3 + $0xd8] sm:$0xff] %vm647, %v606
        %676 = vst.msk [vmem:[#allocation3 + $0xe0] sm:$0xff] %vm647, %v608
        %677 = vst.msk [vmem:[#allocation3 + $0xe8] sm:$0xff] %vm647, %v610
        %678 = vst.msk [vmem:[#allocation3 + $0xf0] sm:$0xff] %vm647, %v612
        %679 = vst.msk [vmem:[#allocation3 + $0xf8] sm:$0xff] %vm647, %v614
        %v680 = vld [vmem:[#allocation2 + $0x4] sm:$0xff]
        %v681 = vld [vmem:[#allocation2 + $0xc] sm:$0xff]
        %v682 = vld [vmem:[#allocation2 + $0x1c] sm:$0xff]
        %v683 = vld [vmem:[#allocation2 + $0x24] sm:$0xff]
        %v684 = vld [vmem:[#allocation2 + $0x34] sm:$0xff]
        %v685 = vld [vmem:[#allocation2 + $0x3c] sm:$0xff]
        %v686 = vld [vmem:[#allocation2 + $0x4c] sm:$0xff]
        %v687 = vld [vmem:[#allocation2 + $0x54] sm:$0xff]
        %v688 = vld [vmem:[#allocation2 + $0x64] sm:$0xff]
        %v689 = vld [vmem:[#allocation2 + $0x6c] sm:$0xff]
        %v690 = vld [vmem:[#allocation2 + $0x7c] sm:$0xff]
        %v691 = vld [vmem:[#allocation2 + $0x84] sm:$0xff]
        %v692 = vld [vmem:[#allocation2 + $0x94] sm:$0xff]
        %v693 = vld [vmem:[#allocation2 + $0x9c] sm:$0xff]
        %v694 = vld [vmem:[#allocation2 + $0xac] sm:$0xff]
        %v695 = vld [vmem:[#allocation2 + $0xb4] sm:$0xff]
        %v696 = vld [vmem:[#allocation2 + $0xc4] sm:$0xff]
        %v697 = vld [vmem:[#allocation2 + $0xcc] sm:$0xff]
        %v698 = vld [vmem:[#allocation2 + $0xdc] sm:$0xff]
        %v699 = vld [vmem:[#allocation2 + $0xe4] sm:$0xff]
        %v700 = vld [vmem:[#allocation2 + $0xf4] sm:$0xff]
        %v701 = vld [vmem:[#allocation2 + $0xfc] sm:$0xff]
        %v702 = vld [vmem:[#allocation2 + $0x10c] sm:$0xff]
        %v703 = vld [vmem:[#allocation2 + $0x114] sm:$0xff]
        %v704 = vld [vmem:[#allocation2 + $0x124] sm:$0xff]
        %v705 = vld [vmem:[#allocation2 + $0x12c] sm:$0xff]
        %v706 = vld [vmem:[#allocation2 + $0x13c] sm:$0xff]
        %v707 = vld [vmem:[#allocation2 + $0x144] sm:$0xff]
        %v708 = vld [vmem:[#allocation2 + $0x154] sm:$0xff]
        %v709 = vld [vmem:[#allocation2 + $0x15c] sm:$0xff]
        %v710 = vld [vmem:[#allocation2 + $0x16c] sm:$0xff]
        %v711 = vld [vmem:[#allocation2 + $0x174] sm:$0xff]
        %744 = vrot.lane.b32.xlu0 %v680, 16
        %v745 = vpop.permute.xlu0 %744
        %746 = vrot.lane.b32.xlu0 %v681, 16
        %v747 = vpop.permute.xlu0 %746
        %748 = vrot.lane.b32.xlu0 %v682, 16
        %v749 = vpop.permute.xlu0 %748
        %750 = vrot.lane.b32.xlu0 %v683, 16
        %v751 = vpop.permute.xlu0 %750
        %752 = vrot.lane.b32.xlu0 %v684, 16
        %v753 = vpop.permute.xlu0 %752
        %754 = vrot.lane.b32.xlu0 %v685, 16
        %v755 = vpop.permute.xlu0 %754
        %756 = vrot.lane.b32.xlu0 %v686, 16
        %v757 = vpop.permute.xlu0 %756
        %758 = vrot.lane.b32.xlu0 %v687, 16
        %v759 = vpop.permute.xlu0 %758
        %760 = vrot.lane.b32.xlu0 %v688, 16
        %v761 = vpop.permute.xlu0 %760
        %762 = vrot.lane.b32.xlu0 %v689, 16
        %v763 = vpop.permute.xlu0 %762
        %764 = vrot.lane.b32.xlu0 %v690, 16
        %v765 = vpop.permute.xlu0 %764
        %766 = vrot.lane.b32.xlu0 %v691, 16
        %v767 = vpop.permute.xlu0 %766
        %768 = vrot.lane.b32.xlu0 %v692, 16
        %v769 = vpop.permute.xlu0 %768
        %770 = vrot.lane.b32.xlu0 %v693, 16
        %v771 = vpop.permute.xlu0 %770
        %772 = vrot.lane.b32.xlu0 %v694, 16
        %v773 = vpop.permute.xlu0 %772
        %774 = vrot.lane.b32.xlu0 %v695, 16
        %v775 = vpop.permute.xlu0 %774
        %776 = vrot.lane.b32.xlu0 %v696, 16
        %v777 = vpop.permute.xlu0 %776
        %778 = vrot.lane.b32.xlu0 %v697, 16
        %v779 = vpop.permute.xlu0 %778
        %780 = vrot.lane.b32.xlu0 %v698, 16
        %v781 = vpop.permute.xlu0 %780
        %782 = vrot.lane.b32.xlu0 %v699, 16
        %v783 = vpop.permute.xlu0 %782
        %784 = vrot.lane.b32.xlu0 %v700, 16
        %v785 = vpop.permute.xlu0 %784
        %786 = vrot.lane.b32.xlu0 %v701, 16
        %v787 = vpop.permute.xlu0 %786
        %788 = vrot.lane.b32.xlu0 %v702, 16
        %v789 = vpop.permute.xlu0 %788
        %790 = vrot.lane.b32.xlu0 %v703, 16
        %v791 = vpop.permute.xlu0 %790
        %792 = vrot.lane.b32.xlu0 %v704, 16
        %v793 = vpop.permute.xlu0 %792
        %794 = vrot.lane.b32.xlu0 %v705, 16
        %v795 = vpop.permute.xlu0 %794
        %796 = vrot.lane.b32.xlu0 %v706, 16
        %v797 = vpop.permute.xlu0 %796
        %798 = vrot.lane.b32.xlu0 %v707, 16
        %v799 = vpop.permute.xlu0 %798
        %800 = vrot.lane.b32.xlu0 %v708, 16
        %v801 = vpop.permute.xlu0 %800
        %802 = vrot.lane.b32.xlu0 %v709, 16
        %v803 = vpop.permute.xlu0 %802
        %804 = vrot.lane.b32.xlu0 %v710, 16
        %v805 = vpop.permute.xlu0 %804
        %806 = vrot.lane.b32.xlu0 %v711, 16
        %v807 = vpop.permute.xlu0 %806
        %vm840 = vcmask 195712
        %841 = vst.msk [vmem:[#allocation3] sm:$0xff] %vm840, %v745
        %842 = vst.msk [vmem:[#allocation3 + $0x8] sm:$0xff] %vm840, %v747
        %843 = vst.msk [vmem:[#allocation3 + $0x10] sm:$0xff] %vm840, %v749
        %844 = vst.msk [vmem:[#allocation3 + $0x18] sm:$0xff] %vm840, %v751
        %845 = vst.msk [vmem:[#allocation3 + $0x20] sm:$0xff] %vm840, %v753
        %846 = vst.msk [vmem:[#allocation3 + $0x28] sm:$0xff] %vm840, %v755
        %847 = vst.msk [vmem:[#allocation3 + $0x30] sm:$0xff] %vm840, %v757
        %848 = vst.msk [vmem:[#allocation3 + $0x38] sm:$0xff] %vm840, %v759
        %849 = vst.msk [vmem:[#allocation3 + $0x40] sm:$0xff] %vm840, %v761
        %850 = vst.msk [vmem:[#allocation3 + $0x48] sm:$0xff] %vm840, %v763
        %851 = vst.msk [vmem:[#allocation3 + $0x50] sm:$0xff] %vm840, %v765
        %852 = vst.msk [vmem:[#allocation3 + $0x58] sm:$0xff] %vm840, %v767
        %853 = vst.msk [vmem:[#allocation3 + $0x60] sm:$0xff] %vm840, %v769
        %854 = vst.msk [vmem:[#allocation3 + $0x68] sm:$0xff] %vm840, %v771
        %855 = vst.msk [vmem:[#allocation3 + $0x70] sm:$0xff] %vm840, %v773
        %856 = vst.msk [vmem:[#allocation3 + $0x78] sm:$0xff] %vm840, %v775
        %857 = vst.msk [vmem:[#allocation3 + $0x80] sm:$0xff] %vm840, %v777
        %858 = vst.msk [vmem:[#allocation3 + $0x88] sm:$0xff] %vm840, %v779
        %859 = vst.msk [vmem:[#allocation3 + $0x90] sm:$0xff] %vm840, %v781
        %860 = vst.msk [vmem:[#allocation3 + $0x98] sm:$0xff] %vm840, %v783
        %861 = vst.msk [vmem:[#allocation3 + $0xa0] sm:$0xff] %vm840, %v785
        %862 = vst.msk [vmem:[#allocation3 + $0xa8] sm:$0xff] %vm840, %v787
        %863 = vst.msk [vmem:[#allocation3 + $0xb0] sm:$0xff] %vm840, %v789
        %864 = vst.msk [vmem:[#allocation3 + $0xb8] sm:$0xff] %vm840, %v791
        %865 = vst.msk [vmem:[#allocation3 + $0xc0] sm:$0xff] %vm840, %v793
        %866 = vst.msk [vmem:[#allocation3 + $0xc8] sm:$0xff] %vm840, %v795
        %867 = vst.msk [vmem:[#allocation3 + $0xd0] sm:$0xff] %vm840, %v797
        %868 = vst.msk [vmem:[#allocation3 + $0xd8] sm:$0xff] %vm840, %v799
        %869 = vst.msk [vmem:[#allocation3 + $0xe0] sm:$0xff] %vm840, %v801
        %870 = vst.msk [vmem:[#allocation3 + $0xe8] sm:$0xff] %vm840, %v803
        %871 = vst.msk [vmem:[#allocation3 + $0xf0] sm:$0xff] %vm840, %v805
        %872 = vst.msk [vmem:[#allocation3 + $0xf8] sm:$0xff] %vm840, %v807
        %v873 = vld [vmem:[%s390] sm:$0xff]
        %v874 = vld [vmem:[%s390 + $0x8] sm:$0xff]
        %v875 = vld [vmem:[%s390 + $0x18] sm:$0xff]
        %v876 = vld [vmem:[%s390 + $0x20] sm:$0xff]
        %v877 = vld [vmem:[%s390 + $0x30] sm:$0xff]
        %v878 = vld [vmem:[%s390 + $0x38] sm:$0xff]
        %v879 = vld [vmem:[%s390 + $0x48] sm:$0xff]
        %v880 = vld [vmem:[%s390 + $0x50] sm:$0xff]
        %v881 = vld [vmem:[%s390 + $0x60] sm:$0xff]
        %v882 = vld [vmem:[%s390 + $0x68] sm:$0xff]
        %v883 = vld [vmem:[%s390 + $0x78] sm:$0xff]
        %v884 = vld [vmem:[%s390 + $0x80] sm:$0xff]
        %v885 = vld [vmem:[%s390 + $0x90] sm:$0xff]
        %v886 = vld [vmem:[%s390 + $0x98] sm:$0xff]
        %v887 = vld [vmem:[%s390 + $0xa8] sm:$0xff]
        %v888 = vld [vmem:[%s390 + $0xb0] sm:$0xff]
        %v889 = vld [vmem:[%s390 + $0xc0] sm:$0xff]
        %v890 = vld [vmem:[%s390 + $0xc8] sm:$0xff]
        %v891 = vld [vmem:[%s390 + $0xd8] sm:$0xff]
        %v892 = vld [vmem:[%s390 + $0xe0] sm:$0xff]
        %v893 = vld [vmem:[%s390 + $0xf0] sm:$0xff]
        %v894 = vld [vmem:[%s390 + $0xf8] sm:$0xff]
        %v895 = vld [vmem:[%s390 + $0x108] sm:$0xff]
        %v896 = vld [vmem:[%s390 + $0x110] sm:$0xff]
        %v897 = vld [vmem:[%s390 + $0x120] sm:$0xff]
        %v898 = vld [vmem:[%s390 + $0x128] sm:$0xff]
        %v899 = vld [vmem:[%s390 + $0x138] sm:$0xff]
        %v900 = vld [vmem:[%s390 + $0x140] sm:$0xff]
        %v901 = vld [vmem:[%s390 + $0x150] sm:$0xff]
        %v902 = vld [vmem:[%s390 + $0x158] sm:$0xff]
        %v903 = vld [vmem:[%s390 + $0x168] sm:$0xff]
        %v904 = vld [vmem:[%s390 + $0x170] sm:$0xff]
        %937 = vrot.lane.b32.xlu0 %v873, 24
        %v938 = vpop.permute.xlu0 %937
        %939 = vrot.lane.b32.xlu0 %v874, 24
        %v940 = vpop.permute.xlu0 %939
        %941 = vrot.lane.b32.xlu0 %v875, 24
        %v942 = vpop.permute.xlu0 %941
        %943 = vrot.lane.b32.xlu0 %v876, 24
        %v944 = vpop.permute.xlu0 %943
        %945 = vrot.lane.b32.xlu0 %v877, 24
        %v946 = vpop.permute.xlu0 %945
        %947 = vrot.lane.b32.xlu0 %v878, 24
        %v948 = vpop.permute.xlu0 %947
        %949 = vrot.lane.b32.xlu0 %v879, 24
        %v950 = vpop.permute.xlu0 %949
        %951 = vrot.lane.b32.xlu0 %v880, 24
        %v952 = vpop.permute.xlu0 %951
        %953 = vrot.lane.b32.xlu0 %v881, 24
        %v954 = vpop.permute.xlu0 %953
        %955 = vrot.lane.b32.xlu0 %v882, 24
        %v956 = vpop.permute.xlu0 %955
        %957 = vrot.lane.b32.xlu0 %v883, 24
        %v958 = vpop.permute.xlu0 %957
        %959 = vrot.lane.b32.xlu0 %v884, 24
        %v960 = vpop.permute.xlu0 %959
        %961 = vrot.lane.b32.xlu0 %v885, 24
        %v962 = vpop.permute.xlu0 %961
        %963 = vrot.lane.b32.xlu0 %v886, 24
        %v964 = vpop.permute.xlu0 %963
        %965 = vrot.lane.b32.xlu0 %v887, 24
        %v966 = vpop.permute.xlu0 %965
        %967 = vrot.lane.b32.xlu0 %v888, 24
        %v968 = vpop.permute.xlu0 %967
        %969 = vrot.lane.b32.xlu0 %v889, 24
        %v970 = vpop.permute.xlu0 %969
        %971 = vrot.lane.b32.xlu0 %v890, 24
        %v972 = vpop.permute.xlu0 %971
        %973 = vrot.lane.b32.xlu0 %v891, 24
        %v974 = vpop.permute.xlu0 %973
        %975 = vrot.lane.b32.xlu0 %v892, 24
        %v976 = vpop.permute.xlu0 %975
        %977 = vrot.lane.b32.xlu0 %v893, 24
        %v978 = vpop.permute.xlu0 %977
        %979 = vrot.lane.b32.xlu0 %v894, 24
        %v980 = vpop.permute.xlu0 %979
        %981 = vrot.lane.b32.xlu0 %v895, 24
        %v982 = vpop.permute.xlu0 %981
        %983 = vrot.lane.b32.xlu0 %v896, 24
        %v984 = vpop.permute.xlu0 %983
        %985 = vrot.lane.b32.xlu0 %v897, 24
        %v986 = vpop.permute.xlu0 %985
        %987 = vrot.lane.b32.xlu0 %v898, 24
        %v988 = vpop.permute.xlu0 %987
        %989 = vrot.lane.b32.xlu0 %v899, 24
        %v990 = vpop.permute.xlu0 %989
        %991 = vrot.lane.b32.xlu0 %v900, 24
        %v992 = vpop.permute.xlu0 %991
        %993 = vrot.lane.b32.xlu0 %v901, 24
        %v994 = vpop.permute.xlu0 %993
        %995 = vrot.lane.b32.xlu0 %v902, 24
        %v996 = vpop.permute.xlu0 %995
        %997 = vrot.lane.b32.xlu0 %v903, 24
        %v998 = vpop.permute.xlu0 %997
        %999 = vrot.lane.b32.xlu0 %v904, 24
        %v1000 = vpop.permute.xlu0 %999
        %vm1033 = vcmask 261312
        %1034 = vst.msk [vmem:[#allocation3] sm:$0xff] %vm1033, %v938
        %1035 = vst.msk [vmem:[#allocation3 + $0x8] sm:$0xff] %vm1033, %v940
        %1036 = vst.msk [vmem:[#allocation3 + $0x10] sm:$0xff] %vm1033, %v942
        %1037 = vst.msk [vmem:[#allocation3 + $0x18] sm:$0xff] %vm1033, %v944
        %1038 = vst.msk [vmem:[#allocation3 + $0x20] sm:$0xff] %vm1033, %v946
        %1039 = vst.msk [vmem:[#allocation3 + $0x28] sm:$0xff] %vm1033, %v948
        %1040 = vst.msk [vmem:[#allocation3 + $0x30] sm:$0xff] %vm1033, %v950
        %1041 = vst.msk [vmem:[#allocation3 + $0x38] sm:$0xff] %vm1033, %v952
        %1042 = vst.msk [vmem:[#allocation3 + $0x40] sm:$0xff] %vm1033, %v954
        %1043 = vst.msk [vmem:[#allocation3 + $0x48] sm:$0xff] %vm1033, %v956
        %1044 = vst.msk [vmem:[#allocation3 + $0x50] sm:$0xff] %vm1033, %v958
        %1045 = vst.msk [vmem:[#allocation3 + $0x58] sm:$0xff] %vm1033, %v960
        %1046 = vst.msk [vmem:[#allocation3 + $0x60] sm:$0xff] %vm1033, %v962
        %1047 = vst.msk [vmem:[#allocation3 + $0x68] sm:$0xff] %vm1033, %v964
        %1048 = vst.msk [vmem:[#allocation3 + $0x70] sm:$0xff] %vm1033, %v966
        %1049 = vst.msk [vmem:[#allocation3 + $0x78] sm:$0xff] %vm1033, %v968
        %1050 = vst.msk [vmem:[#allocation3 + $0x80] sm:$0xff] %vm1033, %v970
        %1051 = vst.msk [vmem:[#allocation3 + $0x88] sm:$0xff] %vm1033, %v972
        %1052 = vst.msk [vmem:[#allocation3 + $0x90] sm:$0xff] %vm1033, %v974
        %1053 = vst.msk [vmem:[#allocation3 + $0x98] sm:$0xff] %vm1033, %v976
        %1054 = vst.msk [vmem:[#allocation3 + $0xa0] sm:$0xff] %vm1033, %v978
        %1055 = vst.msk [vmem:[#allocation3 + $0xa8] sm:$0xff] %vm1033, %v980
        %1056 = vst.msk [vmem:[#allocation3 + $0xb0] sm:$0xff] %vm1033, %v982
        %1057 = vst.msk [vmem:[#allocation3 + $0xb8] sm:$0xff] %vm1033, %v984
        %1058 = vst.msk [vmem:[#allocation3 + $0xc0] sm:$0xff] %vm1033, %v986
        %1059 = vst.msk [vmem:[#allocation3 + $0xc8] sm:$0xff] %vm1033, %v988
        %1060 = vst.msk [vmem:[#allocation3 + $0xd0] sm:$0xff] %vm1033, %v990
        %1061 = vst.msk [vmem:[#allocation3 + $0xd8] sm:$0xff] %vm1033, %v992
        %1062 = vst.msk [vmem:[#allocation3 + $0xe0] sm:$0xff] %vm1033, %v994
        %1063 = vst.msk [vmem:[#allocation3 + $0xe8] sm:$0xff] %vm1033, %v996
        %1064 = vst.msk [vmem:[#allocation3 + $0xf0] sm:$0xff] %vm1033, %v998
        %1065 = vst.msk [vmem:[#allocation3 + $0xf8] sm:$0xff] %vm1033, %v1000
        %v1066 = vld [vmem:[%s390 + $0x2] sm:$0xff]
        %v1067 = vld [vmem:[%s390 + $0xa] sm:$0xff]
        %v1068 = vld [vmem:[%s390 + $0x1a] sm:$0xff]
        %v1069 = vld [vmem:[%s390 + $0x22] sm:$0xff]
        %v1070 = vld [vmem:[%s390 + $0x32] sm:$0xff]
        %v1071 = vld [vmem:[%s390 + $0x3a] sm:$0xff]
        %v1072 = vld [vmem:[%s390 + $0x4a] sm:$0xff]
        %v1073 = vld [vmem:[%s390 + $0x52] sm:$0xff]
        %v1074 = vld [vmem:[%s390 + $0x62] sm:$0xff]
        %v1075 = vld [vmem:[%s390 + $0x6a] sm:$0xff]
        %v1076 = vld [vmem:[%s390 + $0x7a] sm:$0xff]
        %v1077 = vld [vmem:[%s390 + $0x82] sm:$0xff]
        %v1078 = vld [vmem:[%s390 + $0x92] sm:$0xff]
        %v1079 = vld [vmem:[%s390 + $0x9a] sm:$0xff]
        %v1080 = vld [vmem:[%s390 + $0xaa] sm:$0xff]
        %v1081 = vld [vmem:[%s390 + $0xb2] sm:$0xff]
        %v1082 = vld [vmem:[%s390 + $0xc2] sm:$0xff]
        %v1083 = vld [vmem:[%s390 + $0xca] sm:$0xff]
        %v1084 = vld [vmem:[%s390 + $0xda] sm:$0xff]
        %v1085 = vld [vmem:[%s390 + $0xe2] sm:$0xff]
        %v1086 = vld [vmem:[%s390 + $0xf2] sm:$0xff]
        %v1087 = vld [vmem:[%s390 + $0xfa] sm:$0xff]
        %v1088 = vld [vmem:[%s390 + $0x10a] sm:$0xff]
        %v1089 = vld [vmem:[%s390 + $0x112] sm:$0xff]
        %v1090 = vld [vmem:[%s390 + $0x122] sm:$0xff]
        %v1091 = vld [vmem:[%s390 + $0x12a] sm:$0xff]
        %v1092 = vld [vmem:[%s390 + $0x13a] sm:$0xff]
        %v1093 = vld [vmem:[%s390 + $0x142] sm:$0xff]
        %v1094 = vld [vmem:[%s390 + $0x152] sm:$0xff]
        %v1095 = vld [vmem:[%s390 + $0x15a] sm:$0xff]
        %v1096 = vld [vmem:[%s390 + $0x16a] sm:$0xff]
        %v1097 = vld [vmem:[%s390 + $0x172] sm:$0xff]
        %1130 = vrot.lane.b32.xlu0 %v1066, 32
        %v1131 = vpop.permute.xlu0 %1130
        %1132 = vrot.lane.b32.xlu0 %v1067, 32
        %v1133 = vpop.permute.xlu0 %1132
        %1134 = vrot.lane.b32.xlu0 %v1068, 32
        %v1135 = vpop.permute.xlu0 %1134
        %1136 = vrot.lane.b32.xlu0 %v1069, 32
        %v1137 = vpop.permute.xlu0 %1136
        %1138 = vrot.lane.b32.xlu0 %v1070, 32
        %v1139 = vpop.permute.xlu0 %1138
        %1140 = vrot.lane.b32.xlu0 %v1071, 32
        %v1141 = vpop.permute.xlu0 %1140
        %1142 = vrot.lane.b32.xlu0 %v1072, 32
        %v1143 = vpop.permute.xlu0 %1142
        %1144 = vrot.lane.b32.xlu0 %v1073, 32
        %v1145 = vpop.permute.xlu0 %1144
        %1146 = vrot.lane.b32.xlu0 %v1074, 32
        %v1147 = vpop.permute.xlu0 %1146
        %1148 = vrot.lane.b32.xlu0 %v1075, 32
        %v1149 = vpop.permute.xlu0 %1148
        %1150 = vrot.lane.b32.xlu0 %v1076, 32
        %v1151 = vpop.permute.xlu0 %1150
        %1152 = vrot.lane.b32.xlu0 %v1077, 32
        %v1153 = vpop.permute.xlu0 %1152
        %1154 = vrot.lane.b32.xlu0 %v1078, 32
        %v1155 = vpop.permute.xlu0 %1154
        %1156 = vrot.lane.b32.xlu0 %v1079, 32
        %v1157 = vpop.permute.xlu0 %1156
        %1158 = vrot.lane.b32.xlu0 %v1080, 32
        %v1159 = vpop.permute.xlu0 %1158
        %1160 = vrot.lane.b32.xlu0 %v1081, 32
        %v1161 = vpop.permute.xlu0 %1160
        %1162 = vrot.lane.b32.xlu0 %v1082, 32
        %v1163 = vpop.permute.xlu0 %1162
        %1164 = vrot.lane.b32.xlu0 %v1083, 32
        %v1165 = vpop.permute.xlu0 %1164
        %1166 = vrot.lane.b32.xlu0 %v1084, 32
        %v1167 = vpop.permute.xlu0 %1166
        %1168 = vrot.lane.b32.xlu0 %v1085, 32
        %v1169 = vpop.permute.xlu0 %1168
        %1170 = vrot.lane.b32.xlu0 %v1086, 32
        %v1171 = vpop.permute.xlu0 %1170
        %1172 = vrot.lane.b32.xlu0 %v1087, 32
        %v1173 = vpop.permute.xlu0 %1172
        %1174 = vrot.lane.b32.xlu0 %v1088, 32
        %v1175 = vpop.permute.xlu0 %1174
        %1176 = vrot.lane.b32.xlu0 %v1089, 32
        %v1177 = vpop.permute.xlu0 %1176
        %1178 = vrot.lane.b32.xlu0 %v1090, 32
        %v1179 = vpop.permute.xlu0 %1178
        %1180 = vrot.lane.b32.xlu0 %v1091, 32
        %v1181 = vpop.permute.xlu0 %1180
        %1182 = vrot.lane.b32.xlu0 %v1092, 32
        %v1183 = vpop.permute.xlu0 %1182
        %1184 = vrot.lane.b32.xlu0 %v1093, 32
        %v1185 = vpop.permute.xlu0 %1184
        %1186 = vrot.lane.b32.xlu0 %v1094, 32
        %v1187 = vpop.permute.xlu0 %1186
        %1188 = vrot.lane.b32.xlu0 %v1095, 32
        %v1189 = vpop.permute.xlu0 %1188
        %1190 = vrot.lane.b32.xlu0 %v1096, 32
        %v1191 = vpop.permute.xlu0 %1190
        %1192 = vrot.lane.b32.xlu0 %v1097, 32
        %v1193 = vpop.permute.xlu0 %1192
        %vm1226 = vcmask 326912
        %1227 = vst.msk [vmem:[#allocation3] sm:$0xff] %vm1226, %v1131
        %1228 = vst.msk [vmem:[#allocation3 + $0x8] sm:$0xff] %vm1226, %v1133
        %1229 = vst.msk [vmem:[#allocation3 + $0x10] sm:$0xff] %vm1226, %v1135
        %1230 = vst.msk [vmem:[#allocation3 + $0x18] sm:$0xff] %vm1226, %v1137
        %1231 = vst.msk [vmem:[#allocation3 + $0x20] sm:$0xff] %vm1226, %v1139
        %1232 = vst.msk [vmem:[#allocation3 + $0x28] sm:$0xff] %vm1226, %v1141
        %1233 = vst.msk [vmem:[#allocation3 + $0x30] sm:$0xff] %vm1226, %v1143
        %1234 = vst.msk [vmem:[#allocation3 + $0x38] sm:$0xff] %vm1226, %v1145
        %1235 = vst.msk [vmem:[#allocation3 + $0x40] sm:$0xff] %vm1226, %v1147
        %1236 = vst.msk [vmem:[#allocation3 + $0x48] sm:$0xff] %vm1226, %v1149
        %1237 = vst.msk [vmem:[#allocation3 + $0x50] sm:$0xff] %vm1226, %v1151
        %1238 = vst.msk [vmem:[#allocation3 + $0x58] sm:$0xff] %vm1226, %v1153
        %1239 = vst.msk [vmem:[#allocation3 + $0x60] sm:$0xff] %vm1226, %v1155
        %1240 = vst.msk [vmem:[#allocation3 + $0x68] sm:$0xff] %vm1226, %v1157
        %1241 = vst.msk [vmem:[#allocation3 + $0x70] sm:$0xff] %vm1226, %v1159
        %1242 = vst.msk [vmem:[#allocation3 + $0x78] sm:$0xff] %vm1226, %v1161
        %1243 = vst.msk [vmem:[#allocation3 + $0x80] sm:$0xff] %vm1226, %v1163
        %1244 = vst.msk [vmem:[#allocation3 + $0x88] sm:$0xff] %vm1226, %v1165
        %1245 = vst.msk [vmem:[#allocation3 + $0x90] sm:$0xff] %vm1226, %v1167
        %1246 = vst.msk [vmem:[#allocation3 + $0x98] sm:$0xff] %vm1226, %v1169
        %1247 = vst.msk [vmem:[#allocation3 + $0xa0] sm:$0xff] %vm1226, %v1171
        %1248 = vst.msk [vmem:[#allocation3 + $0xa8] sm:$0xff] %vm1226, %v1173
        %1249 = vst.msk [vmem:[#allocation3 + $0xb0] sm:$0xff] %vm1226, %v1175
        %1250 = vst.msk [vmem:[#allocation3 + $0xb8] sm:$0xff] %vm1226, %v1177
        %1251 = vst.msk [vmem:[#allocation3 + $0xc0] sm:$0xff] %vm1226, %v1179
        %1252 = vst.msk [vmem:[#allocation3 + $0xc8] sm:$0xff] %vm1226, %v1181
        %1253 = vst.msk [vmem:[#allocation3 + $0xd0] sm:$0xff] %vm1226, %v1183
        %1254 = vst.msk [vmem:[#allocation3 + $0xd8] sm:$0xff] %vm1226, %v1185
        %1255 = vst.msk [vmem:[#allocation3 + $0xe0] sm:$0xff] %vm1226, %v1187
        %1256 = vst.msk [vmem:[#allocation3 + $0xe8] sm:$0xff] %vm1226, %v1189
        %1257 = vst.msk [vmem:[#allocation3 + $0xf0] sm:$0xff] %vm1226, %v1191
        %1258 = vst.msk [vmem:[#allocation3 + $0xf8] sm:$0xff] %vm1226, %v1193
        %v1259 = vld [vmem:[%s390 + $0x4] sm:$0xff]
        %v1260 = vld [vmem:[%s390 + $0xc] sm:$0xff]
        %v1261 = vld [vmem:[%s390 + $0x1c] sm:$0xff]
        %v1262 = vld [vmem:[%s390 + $0x24] sm:$0xff]
        %v1263 = vld [vmem:[%s390 + $0x34] sm:$0xff]
        %v1264 = vld [vmem:[%s390 + $0x3c] sm:$0xff]
        %v1265 = vld [vmem:[%s390 + $0x4c] sm:$0xff]
        %v1266 = vld [vmem:[%s390 + $0x54] sm:$0xff]
        %v1267 = vld [vmem:[%s390 + $0x64] sm:$0xff]
        %v1268 = vld [vmem:[%s390 + $0x6c] sm:$0xff]
        %v1269 = vld [vmem:[%s390 + $0x7c] sm:$0xff]
        %v1270 = vld [vmem:[%s390 + $0x84] sm:$0xff]
        %v1271 = vld [vmem:[%s390 + $0x94] sm:$0xff]
        %v1272 = vld [vmem:[%s390 + $0x9c] sm:$0xff]
        %v1273 = vld [vmem:[%s390 + $0xac] sm:$0xff]
        %v1274 = vld [vmem:[%s390 + $0xb4] sm:$0xff]
        %v1275 = vld [vmem:[%s390 + $0xc4] sm:$0xff]
        %v1276 = vld [vmem:[%s390 + $0xcc] sm:$0xff]
        %v1277 = vld [vmem:[%s390 + $0xdc] sm:$0xff]
        %v1278 = vld [vmem:[%s390 + $0xe4] sm:$0xff]
        %v1279 = vld [vmem:[%s390 + $0xf4] sm:$0xff]
        %v1280 = vld [vmem:[%s390 + $0xfc] sm:$0xff]
        %v1281 = vld [vmem:[%s390 + $0x10c] sm:$0xff]
        %v1282 = vld [vmem:[%s390 + $0x114] sm:$0xff]
        %v1283 = vld [vmem:[%s390 + $0x124] sm:$0xff]
        %v1284 = vld [vmem:[%s390 + $0x12c] sm:$0xff]
        %v1285 = vld [vmem:[%s390 + $0x13c] sm:$0xff]
        %v1286 = vld [vmem:[%s390 + $0x144] sm:$0xff]
        %v1287 = vld [vmem:[%s390 + $0x154] sm:$0xff]
        %v1288 = vld [vmem:[%s390 + $0x15c] sm:$0xff]
        %v1289 = vld [vmem:[%s390 + $0x16c] sm:$0xff]
        %v1290 = vld [vmem:[%s390 + $0x174] sm:$0xff]
        %1323 = vrot.lane.b32.xlu0 %v1259, 40
        %v1324 = vpop.permute.xlu0 %1323
        %1325 = vrot.lane.b32.xlu0 %v1260, 40
        %v1326 = vpop.permute.xlu0 %1325
        %1327 = vrot.lane.b32.xlu0 %v1261, 40
        %v1328 = vpop.permute.xlu0 %1327
        %1329 = vrot.lane.b32.xlu0 %v1262, 40
        %v1330 = vpop.permute.xlu0 %1329
        %1331 = vrot.lane.b32.xlu0 %v1263, 40
        %v1332 = vpop.permute.xlu0 %1331
        %1333 = vrot.lane.b32.xlu0 %v1264, 40
        %v1334 = vpop.permute.xlu0 %1333
        %1335 = vrot.lane.b32.xlu0 %v1265, 40
        %v1336 = vpop.permute.xlu0 %1335
        %1337 = vrot.lane.b32.xlu0 %v1266, 40
        %v1338 = vpop.permute.xlu0 %1337
        %1339 = vrot.lane.b32.xlu0 %v1267, 40
        %v1340 = vpop.permute.xlu0 %1339
        %1341 = vrot.lane.b32.xlu0 %v1268, 40
        %v1342 = vpop.permute.xlu0 %1341
        %1343 = vrot.lane.b32.xlu0 %v1269, 40
        %v1344 = vpop.permute.xlu0 %1343
        %1345 = vrot.lane.b32.xlu0 %v1270, 40
        %v1346 = vpop.permute.xlu0 %1345
        %1347 = vrot.lane.b32.xlu0 %v1271, 40
        %v1348 = vpop.permute.xlu0 %1347
        %1349 = vrot.lane.b32.xlu0 %v1272, 40
        %v1350 = vpop.permute.xlu0 %1349
        %1351 = vrot.lane.b32.xlu0 %v1273, 40
        %v1352 = vpop.permute.xlu0 %1351
        %1353 = vrot.lane.b32.xlu0 %v1274, 40
        %v1354 = vpop.permute.xlu0 %1353
        %1355 = vrot.lane.b32.xlu0 %v1275, 40
        %v1356 = vpop.permute.xlu0 %1355
        %1357 = vrot.lane.b32.xlu0 %v1276, 40
        %v1358 = vpop.permute.xlu0 %1357
        %1359 = vrot.lane.b32.xlu0 %v1277, 40
        %v1360 = vpop.permute.xlu0 %1359
        %1361 = vrot.lane.b32.xlu0 %v1278, 40
        %v1362 = vpop.permute.xlu0 %1361
        %1363 = vrot.lane.b32.xlu0 %v1279, 40
        %v1364 = vpop.permute.xlu0 %1363
        %1365 = vrot.lane.b32.xlu0 %v1280, 40
        %v1366 = vpop.permute.xlu0 %1365
        %1367 = vrot.lane.b32.xlu0 %v1281, 40
        %v1368 = vpop.permute.xlu0 %1367
        %1369 = vrot.lane.b32.xlu0 %v1282, 40
        %v1370 = vpop.permute.xlu0 %1369
        %1371 = vrot.lane.b32.xlu0 %v1283, 40
        %v1372 = vpop.permute.xlu0 %1371
        %1373 = vrot.lane.b32.xlu0 %v1284, 40
        %v1374 = vpop.permute.xlu0 %1373
        %1375 = vrot.lane.b32.xlu0 %v1285, 40
        %v1376 = vpop.permute.xlu0 %1375
        %1377 = vrot.lane.b32.xlu0 %v1286, 40
        %v1378 = vpop.permute.xlu0 %1377
        %1379 = vrot.lane.b32.xlu0 %v1287, 40
        %v1380 = vpop.permute.xlu0 %1379
        %1381 = vrot.lane.b32.xlu0 %v1288, 40
        %v1382 = vpop.permute.xlu0 %1381
        %1383 = vrot.lane.b32.xlu0 %v1289, 40
        %v1384 = vpop.permute.xlu0 %1383
        %1385 = vrot.lane.b32.xlu0 %v1290, 40
        %v1386 = vpop.permute.xlu0 %1385
        %vm1419 = vcmask 392512
        %1420 = vst.msk [vmem:[#allocation3] sm:$0xff] %vm1419, %v1324
        %1421 = vst.msk [vmem:[#allocation3 + $0x8] sm:$0xff] %vm1419, %v1326
        %1422 = vst.msk [vmem:[#allocation3 + $0x10] sm:$0xff] %vm1419, %v1328
        %1423 = vst.msk [vmem:[#allocation3 + $0x18] sm:$0xff] %vm1419, %v1330
        %1424 = vst.msk [vmem:[#allocation3 + $0x20] sm:$0xff] %vm1419, %v1332
        %1425 = vst.msk [vmem:[#allocation3 + $0x28] sm:$0xff] %vm1419, %v1334
        %1426 = vst.msk [vmem:[#allocation3 + $0x30] sm:$0xff] %vm1419, %v1336
        %1427 = vst.msk [vmem:[#allocation3 + $0x38] sm:$0xff] %vm1419, %v1338
        %1428 = vst.msk [vmem:[#allocation3 + $0x40] sm:$0xff] %vm1419, %v1340
        %1429 = vst.msk [vmem:[#allocation3 + $0x48] sm:$0xff] %vm1419, %v1342
        %1430 = vst.msk [vmem:[#allocation3 + $0x50] sm:$0xff] %vm1419, %v1344
        %1431 = vst.msk [vmem:[#allocation3 + $0x58] sm:$0xff] %vm1419, %v1346
        %1432 = vst.msk [vmem:[#allocation3 + $0x60] sm:$0xff] %vm1419, %v1348
        %1433 = vst.msk [vmem:[#allocation3 + $0x68] sm:$0xff] %vm1419, %v1350
        %1434 = vst.msk [vmem:[#allocation3 + $0x70] sm:$0xff] %vm1419, %v1352
        %1435 = vst.msk [vmem:[#allocation3 + $0x78] sm:$0xff] %vm1419, %v1354
        %1436 = vst.msk [vmem:[#allocation3 + $0x80] sm:$0xff] %vm1419, %v1356
        %1437 = vst.msk [vmem:[#allocation3 + $0x88] sm:$0xff] %vm1419, %v1358
        %1438 = vst.msk [vmem:[#allocation3 + $0x90] sm:$0xff] %vm1419, %v1360
        %1439 = vst.msk [vmem:[#allocation3 + $0x98] sm:$0xff] %vm1419, %v1362
        %1440 = vst.msk [vmem:[#allocation3 + $0xa0] sm:$0xff] %vm1419, %v1364
        %1441 = vst.msk [vmem:[#allocation3 + $0xa8] sm:$0xff] %vm1419, %v1366
        %1442 = vst.msk [vmem:[#allocation3 + $0xb0] sm:$0xff] %vm1419, %v1368
        %1443 = vst.msk [vmem:[#allocation3 + $0xb8] sm:$0xff] %vm1419, %v1370
        %1444 = vst.msk [vmem:[#allocation3 + $0xc0] sm:$0xff] %vm1419, %v1372
        %1445 = vst.msk [vmem:[#allocation3 + $0xc8] sm:$0xff] %vm1419, %v1374
        %1446 = vst.msk [vmem:[#allocation3 + $0xd0] sm:$0xff] %vm1419, %v1376
        %1447 = vst.msk [vmem:[#allocation3 + $0xd8] sm:$0xff] %vm1419, %v1378
        %1448 = vst.msk [vmem:[#allocation3 + $0xe0] sm:$0xff] %vm1419, %v1380
        %1449 = vst.msk [vmem:[#allocation3 + $0xe8] sm:$0xff] %vm1419, %v1382
        %1450 = vst.msk [vmem:[#allocation3 + $0xf0] sm:$0xff] %vm1419, %v1384
        %1451 = vst.msk [vmem:[#allocation3 + $0xf8] sm:$0xff] %vm1419, %v1386
        %s1452 = scalar_lea.vmem [#allocation2], 96
        %v1453 = vld [vmem:[%s1452] sm:$0xff]
        %v1454 = vld [vmem:[%s1452 + $0x8] sm:$0xff]
        %v1455 = vld [vmem:[%s1452 + $0x18] sm:$0xff]
        %v1456 = vld [vmem:[%s1452 + $0x20] sm:$0xff]
        %v1457 = vld [vmem:[%s1452 + $0x30] sm:$0xff]
        %v1458 = vld [vmem:[%s1452 + $0x38] sm:$0xff]
        %v1459 = vld [vmem:[%s1452 + $0x48] sm:$0xff]
        %v1460 = vld [vmem:[%s1452 + $0x50] sm:$0xff]
        %v1461 = vld [vmem:[%s1452 + $0x60] sm:$0xff]
        %v1462 = vld [vmem:[%s1452 + $0x68] sm:$0xff]
        %v1463 = vld [vmem:[%s1452 + $0x78] sm:$0xff]
        %v1464 = vld [vmem:[%s1452 + $0x80] sm:$0xff]
        %v1465 = vld [vmem:[%s1452 + $0x90] sm:$0xff]
        %v1466 = vld [vmem:[%s1452 + $0x98] sm:$0xff]
        %v1467 = vld [vmem:[%s1452 + $0xa8] sm:$0xff]
        %v1468 = vld [vmem:[%s1452 + $0xb0] sm:$0xff]
        %v1469 = vld [vmem:[%s1452 + $0xc0] sm:$0xff]
        %v1470 = vld [vmem:[%s1452 + $0xc8] sm:$0xff]
        %v1471 = vld [vmem:[%s1452 + $0xd8] sm:$0xff]
        %v1472 = vld [vmem:[%s1452 + $0xe0] sm:$0xff]
        %v1473 = vld [vmem:[%s1452 + $0xf0] sm:$0xff]
        %v1474 = vld [vmem:[%s1452 + $0xf8] sm:$0xff]
        %v1475 = vld [vmem:[%s1452 + $0x108] sm:$0xff]
        %v1476 = vld [vmem:[%s1452 + $0x110] sm:$0xff]
        %v1477 = vld [vmem:[%s1452 + $0x120] sm:$0xff]
        %v1478 = vld [vmem:[%s1452 + $0x128] sm:$0xff]
        %v1479 = vld [vmem:[%s1452 + $0x138] sm:$0xff]
        %v1480 = vld [vmem:[%s1452 + $0x140] sm:$0xff]
        %v1481 = vld [vmem:[%s1452 + $0x150] sm:$0xff]
        %v1482 = vld [vmem:[%s1452 + $0x158] sm:$0xff]
        %v1483 = vld [vmem:[%s1452 + $0x168] sm:$0xff]
        %v1484 = vld [vmem:[%s1452 + $0x170] sm:$0xff]
        %1517 = vrot.lane.b32.xlu0 %v1453, 48
        %v1518 = vpop.permute.xlu0 %1517
        %1519 = vrot.lane.b32.xlu0 %v1454, 48
        %v1520 = vpop.permute.xlu0 %1519
        %1521 = vrot.lane.b32.xlu0 %v1455, 48
        %v1522 = vpop.permute.xlu0 %1521
        %1523 = vrot.lane.b32.xlu0 %v1456, 48
        %v1524 = vpop.permute.xlu0 %1523
        %1525 = vrot.lane.b32.xlu0 %v1457, 48
        %v1526 = vpop.permute.xlu0 %1525
        %1527 = vrot.lane.b32.xlu0 %v1458, 48
        %v1528 = vpop.permute.xlu0 %1527
        %1529 = vrot.lane.b32.xlu0 %v1459, 48
        %v1530 = vpop.permute.xlu0 %1529
        %1531 = vrot.lane.b32.xlu0 %v1460, 48
        %v1532 = vpop.permute.xlu0 %1531
        %1533 = vrot.lane.b32.xlu0 %v1461, 48
        %v1534 = vpop.permute.xlu0 %1533
        %1535 = vrot.lane.b32.xlu0 %v1462, 48
        %v1536 = vpop.permute.xlu0 %1535
        %1537 = vrot.lane.b32.xlu0 %v1463, 48
        %v1538 = vpop.permute.xlu0 %1537
        %1539 = vrot.lane.b32.xlu0 %v1464, 48
        %v1540 = vpop.permute.xlu0 %1539
        %1541 = vrot.lane.b32.xlu0 %v1465, 48
        %v1542 = vpop.permute.xlu0 %1541
        %1543 = vrot.lane.b32.xlu0 %v1466, 48
        %v1544 = vpop.permute.xlu0 %1543
        %1545 = vrot.lane.b32.xlu0 %v1467, 48
        %v1546 = vpop.permute.xlu0 %1545
        %1547 = vrot.lane.b32.xlu0 %v1468, 48
        %v1548 = vpop.permute.xlu0 %1547
        %1549 = vrot.lane.b32.xlu0 %v1469, 48
        %v1550 = vpop.permute.xlu0 %1549
        %1551 = vrot.lane.b32.xlu0 %v1470, 48
        %v1552 = vpop.permute.xlu0 %1551
        %1553 = vrot.lane.b32.xlu0 %v1471, 48
        %v1554 = vpop.permute.xlu0 %1553
        %1555 = vrot.lane.b32.xlu0 %v1472, 48
        %v1556 = vpop.permute.xlu0 %1555
        %1557 = vrot.lane.b32.xlu0 %v1473, 48
        %v1558 = vpop.permute.xlu0 %1557
        %1559 = vrot.lane.b32.xlu0 %v1474, 48
        %v1560 = vpop.permute.xlu0 %1559
        %1561 = vrot.lane.b32.xlu0 %v1475, 48
        %v1562 = vpop.permute.xlu0 %1561
        %1563 = vrot.lane.b32.xlu0 %v1476, 48
        %v1564 = vpop.permute.xlu0 %1563
        %1565 = vrot.lane.b32.xlu0 %v1477, 48
        %v1566 = vpop.permute.xlu0 %1565
        %1567 = vrot.lane.b32.xlu0 %v1478, 48
        %v1568 = vpop.permute.xlu0 %1567
        %1569 = vrot.lane.b32.xlu0 %v1479, 48
        %v1570 = vpop.permute.xlu0 %1569
        %1571 = vrot.lane.b32.xlu0 %v1480, 48
        %v1572 = vpop.permute.xlu0 %1571
        %1573 = vrot.lane.b32.xlu0 %v1481, 48
        %v1574 = vpop.permute.xlu0 %1573
        %1575 = vrot.lane.b32.xlu0 %v1482, 48
        %v1576 = vpop.permute.xlu0 %1575
        %1577 = vrot.lane.b32.xlu0 %v1483, 48
        %v1578 = vpop.permute.xlu0 %1577
        %1579 = vrot.lane.b32.xlu0 %v1484, 48
        %v1580 = vpop.permute.xlu0 %1579
        %vm1613 = vcmask 458112
        %1614 = vst.msk [vmem:[#allocation3] sm:$0xff] %vm1613, %v1518
        %1615 = vst.msk [vmem:[#allocation3 + $0x8] sm:$0xff] %vm1613, %v1520
        %1616 = vst.msk [vmem:[#allocation3 + $0x10] sm:$0xff] %vm1613, %v1522
        %1617 = vst.msk [vmem:[#allocation3 + $0x18] sm:$0xff] %vm1613, %v1524
        %1618 = vst.msk [vmem:[#allocation3 + $0x20] sm:$0xff] %vm1613, %v1526
        %1619 = vst.msk [vmem:[#allocation3 + $0x28] sm:$0xff] %vm1613, %v1528
        %1620 = vst.msk [vmem:[#allocation3 + $0x30] sm:$0xff] %vm1613, %v1530
        %1621 = vst.msk [vmem:[#allocation3 + $0x38] sm:$0xff] %vm1613, %v1532
        %1622 = vst.msk [vmem:[#allocation3 + $0x40] sm:$0xff] %vm1613, %v1534
        %1623 = vst.msk [vmem:[#allocation3 + $0x48] sm:$0xff] %vm1613, %v1536
        %1624 = vst.msk [vmem:[#allocation3 + $0x50] sm:$0xff] %vm1613, %v1538
        %1625 = vst.msk [vmem:[#allocation3 + $0x58] sm:$0xff] %vm1613, %v1540
        %1626 = vst.msk [vmem:[#allocation3 + $0x60] sm:$0xff] %vm1613, %v1542
        %1627 = vst.msk [vmem:[#allocation3 + $0x68] sm:$0xff] %vm1613, %v1544
        %1628 = vst.msk [vmem:[#allocation3 + $0x70] sm:$0xff] %vm1613, %v1546
        %1629 = vst.msk [vmem:[#allocation3 + $0x78] sm:$0xff] %vm1613, %v1548
        %1630 = vst.msk [vmem:[#allocation3 + $0x80] sm:$0xff] %vm1613, %v1550
        %1631 = vst.msk [vmem:[#allocation3 + $0x88] sm:$0xff] %vm1613, %v1552
        %1632 = vst.msk [vmem:[#allocation3 + $0x90] sm:$0xff] %vm1613, %v1554
        %1633 = vst.msk [vmem:[#allocation3 + $0x98] sm:$0xff] %vm1613, %v1556
        %1634 = vst.msk [vmem:[#allocation3 + $0xa0] sm:$0xff] %vm1613, %v1558
        %1635 = vst.msk [vmem:[#allocation3 + $0xa8] sm:$0xff] %vm1613, %v1560
        %1636 = vst.msk [vmem:[#allocation3 + $0xb0] sm:$0xff] %vm1613, %v1562
        %1637 = vst.msk [vmem:[#allocation3 + $0xb8] sm:$0xff] %vm1613, %v1564
        %1638 = vst.msk [vmem:[#allocation3 + $0xc0] sm:$0xff] %vm1613, %v1566
        %1639 = vst.msk [vmem:[#allocation3 + $0xc8] sm:$0xff] %vm1613, %v1568
        %1640 = vst.msk [vmem:[#allocation3 + $0xd0] sm:$0xff] %vm1613, %v1570
        %1641 = vst.msk [vmem:[#allocation3 + $0xd8] sm:$0xff] %vm1613, %v1572
        %1642 = vst.msk [vmem:[#allocation3 + $0xe0] sm:$0xff] %vm1613, %v1574
        %1643 = vst.msk [vmem:[#allocation3 + $0xe8] sm:$0xff] %vm1613, %v1576
        %1644 = vst.msk [vmem:[#allocation3 + $0xf0] sm:$0xff] %vm1613, %v1578
        %1645 = vst.msk [vmem:[#allocation3 + $0xf8] sm:$0xff] %vm1613, %v1580
        %v1646 = vld [vmem:[%s1452 + $0x2] sm:$0xff]
        %v1647 = vld [vmem:[%s1452 + $0xa] sm:$0xff]
        %v1648 = vld [vmem:[%s1452 + $0x1a] sm:$0xff]
        %v1649 = vld [vmem:[%s1452 + $0x22] sm:$0xff]
        %v1650 = vld [vmem:[%s1452 + $0x32] sm:$0xff]
        %v1651 = vld [vmem:[%s1452 + $0x3a] sm:$0xff]
        %v1652 = vld [vmem:[%s1452 + $0x4a] sm:$0xff]
        %v1653 = vld [vmem:[%s1452 + $0x52] sm:$0xff]
        %v1654 = vld [vmem:[%s1452 + $0x62] sm:$0xff]
        %v1655 = vld [vmem:[%s1452 + $0x6a] sm:$0xff]
        %v1656 = vld [vmem:[%s1452 + $0x7a] sm:$0xff]
        %v1657 = vld [vmem:[%s1452 + $0x82] sm:$0xff]
        %v1658 = vld [vmem:[%s1452 + $0x92] sm:$0xff]
        %v1659 = vld [vmem:[%s1452 + $0x9a] sm:$0xff]
        %v1660 = vld [vmem:[%s1452 + $0xaa] sm:$0xff]
        %v1661 = vld [vmem:[%s1452 + $0xb2] sm:$0xff]
        %v1662 = vld [vmem:[%s1452 + $0xc2] sm:$0xff]
        %v1663 = vld [vmem:[%s1452 + $0xca] sm:$0xff]
        %v1664 = vld [vmem:[%s1452 + $0xda] sm:$0xff]
        %v1665 = vld [vmem:[%s1452 + $0xe2] sm:$0xff]
        %v1666 = vld [vmem:[%s1452 + $0xf2] sm:$0xff]
        %v1667 = vld [vmem:[%s1452 + $0xfa] sm:$0xff]
        %v1668 = vld [vmem:[%s1452 + $0x10a] sm:$0xff]
        %v1669 = vld [vmem:[%s1452 + $0x112] sm:$0xff]
        %v1670 = vld [vmem:[%s1452 + $0x122] sm:$0xff]
        %v1671 = vld [vmem:[%s1452 + $0x12a] sm:$0xff]
        %v1672 = vld [vmem:[%s1452 + $0x13a] sm:$0xff]
        %v1673 = vld [vmem:[%s1452 + $0x142] sm:$0xff]
        %v1674 = vld [vmem:[%s1452 + $0x152] sm:$0xff]
        %v1675 = vld [vmem:[%s1452 + $0x15a] sm:$0xff]
        %v1676 = vld [vmem:[%s1452 + $0x16a] sm:$0xff]
        %v1677 = vld [vmem:[%s1452 + $0x172] sm:$0xff]
        %1710 = vrot.lane.b32.xlu0 %v1646, 56
        %v1711 = vpop.permute.xlu0 %1710
        %1712 = vrot.lane.b32.xlu0 %v1647, 56
        %v1713 = vpop.permute.xlu0 %1712
        %1714 = vrot.lane.b32.xlu0 %v1648, 56
        %v1715 = vpop.permute.xlu0 %1714
        %1716 = vrot.lane.b32.xlu0 %v1649, 56
        %v1717 = vpop.permute.xlu0 %1716
        %1718 = vrot.lane.b32.xlu0 %v1650, 56
        %v1719 = vpop.permute.xlu0 %1718
        %1720 = vrot.lane.b32.xlu0 %v1651, 56
        %v1721 = vpop.permute.xlu0 %1720
        %1722 = vrot.lane.b32.xlu0 %v1652, 56
        %v1723 = vpop.permute.xlu0 %1722
        %1724 = vrot.lane.b32.xlu0 %v1653, 56
        %v1725 = vpop.permute.xlu0 %1724
        %1726 = vrot.lane.b32.xlu0 %v1654, 56
        %v1727 = vpop.permute.xlu0 %1726
        %1728 = vrot.lane.b32.xlu0 %v1655, 56
        %v1729 = vpop.permute.xlu0 %1728
        %1730 = vrot.lane.b32.xlu0 %v1656, 56
        %v1731 = vpop.permute.xlu0 %1730
        %1732 = vrot.lane.b32.xlu0 %v1657, 56
        %v1733 = vpop.permute.xlu0 %1732
        %1734 = vrot.lane.b32.xlu0 %v1658, 56
        %v1735 = vpop.permute.xlu0 %1734
        %1736 = vrot.lane.b32.xlu0 %v1659, 56
        %v1737 = vpop.permute.xlu0 %1736
        %1738 = vrot.lane.b32.xlu0 %v1660, 56
        %v1739 = vpop.permute.xlu0 %1738
        %1740 = vrot.lane.b32.xlu0 %v1661, 56
        %v1741 = vpop.permute.xlu0 %1740
        %1742 = vrot.lane.b32.xlu0 %v1662, 56
        %v1743 = vpop.permute.xlu0 %1742
        %1744 = vrot.lane.b32.xlu0 %v1663, 56
        %v1745 = vpop.permute.xlu0 %1744
        %1746 = vrot.lane.b32.xlu0 %v1664, 56
        %v1747 = vpop.permute.xlu0 %1746
        %1748 = vrot.lane.b32.xlu0 %v1665, 56
        %v1749 = vpop.permute.xlu0 %1748
        %1750 = vrot.lane.b32.xlu0 %v1666, 56
        %v1751 = vpop.permute.xlu0 %1750
        %1752 = vrot.lane.b32.xlu0 %v1667, 56
        %v1753 = vpop.permute.xlu0 %1752
        %1754 = vrot.lane.b32.xlu0 %v1668, 56
        %v1755 = vpop.permute.xlu0 %1754
        %1756 = vrot.lane.b32.xlu0 %v1669, 56
        %v1757 = vpop.permute.xlu0 %1756
        %1758 = vrot.lane.b32.xlu0 %v1670, 56
        %v1759 = vpop.permute.xlu0 %1758
        %1760 = vrot.lane.b32.xlu0 %v1671, 56
        %v1761 = vpop.permute.xlu0 %1760
        %1762 = vrot.lane.b32.xlu0 %v1672, 56
        %v1763 = vpop.permute.xlu0 %1762
        %1764 = vrot.lane.b32.xlu0 %v1673, 56
        %v1765 = vpop.permute.xlu0 %1764
        %1766 = vrot.lane.b32.xlu0 %v1674, 56
        %v1767 = vpop.permute.xlu0 %1766
        %1768 = vrot.lane.b32.xlu0 %v1675, 56
        %v1769 = vpop.permute.xlu0 %1768
        %1770 = vrot.lane.b32.xlu0 %v1676, 56
        %v1771 = vpop.permute.xlu0 %1770
        %1772 = vrot.lane.b32.xlu0 %v1677, 56
        %v1773 = vpop.permute.xlu0 %1772
        %vm1806 = vcmask 523712
        %1807 = vst.msk [vmem:[#allocation3] sm:$0xff] %vm1806, %v1711
        %1808 = vst.msk [vmem:[#allocation3 + $0x8] sm:$0xff] %vm1806, %v1713
        %1809 = vst.msk [vmem:[#allocation3 + $0x10] sm:$0xff] %vm1806, %v1715
        %1810 = vst.msk [vmem:[#allocation3 + $0x18] sm:$0xff] %vm1806, %v1717
        %1811 = vst.msk [vmem:[#allocation3 + $0x20] sm:$0xff] %vm1806, %v1719
        %1812 = vst.msk [vmem:[#allocation3 + $0x28] sm:$0xff] %vm1806, %v1721
        %1813 = vst.msk [vmem:[#allocation3 + $0x30] sm:$0xff] %vm1806, %v1723
        %1814 = vst.msk [vmem:[#allocation3 + $0x38] sm:$0xff] %vm1806, %v1725
        %1815 = vst.msk [vmem:[#allocation3 + $0x40] sm:$0xff] %vm1806, %v1727
        %1816 = vst.msk [vmem:[#allocation3 + $0x48] sm:$0xff] %vm1806, %v1729
        %1817 = vst.msk [vmem:[#allocation3 + $0x50] sm:$0xff] %vm1806, %v1731
        %1818 = vst.msk [vmem:[#allocation3 + $0x58] sm:$0xff] %vm1806, %v1733
        %1819 = vst.msk [vmem:[#allocation3 + $0x60] sm:$0xff] %vm1806, %v1735
        %1820 = vst.msk [vmem:[#allocation3 + $0x68] sm:$0xff] %vm1806, %v1737
        %1821 = vst.msk [vmem:[#allocation3 + $0x70] sm:$0xff] %vm1806, %v1739
        %1822 = vst.msk [vmem:[#allocation3 + $0x78] sm:$0xff] %vm1806, %v1741
        %1823 = vst.msk [vmem:[#allocation3 + $0x80] sm:$0xff] %vm1806, %v1743
        %1824 = vst.msk [vmem:[#allocation3 + $0x88] sm:$0xff] %vm1806, %v1745
        %1825 = vst.msk [vmem:[#allocation3 + $0x90] sm:$0xff] %vm1806, %v1747
        %1826 = vst.msk [vmem:[#allocation3 + $0x98] sm:$0xff] %vm1806, %v1749
        %1827 = vst.msk [vmem:[#allocation3 + $0xa0] sm:$0xff] %vm1806, %v1751
        %1828 = vst.msk [vmem:[#allocation3 + $0xa8] sm:$0xff] %vm1806, %v1753
        %1829 = vst.msk [vmem:[#allocation3 + $0xb0] sm:$0xff] %vm1806, %v1755
        %1830 = vst.msk [vmem:[#allocation3 + $0xb8] sm:$0xff] %vm1806, %v1757
        %1831 = vst.msk [vmem:[#allocation3 + $0xc0] sm:$0xff] %vm1806, %v1759
        %1832 = vst.msk [vmem:[#allocation3 + $0xc8] sm:$0xff] %vm1806, %v1761
        %1833 = vst.msk [vmem:[#allocation3 + $0xd0] sm:$0xff] %vm1806, %v1763
        %1834 = vst.msk [vmem:[#allocation3 + $0xd8] sm:$0xff] %vm1806, %v1765
        %1835 = vst.msk [vmem:[#allocation3 + $0xe0] sm:$0xff] %vm1806, %v1767
        %1836 = vst.msk [vmem:[#allocation3 + $0xe8] sm:$0xff] %vm1806, %v1769
        %1837 = vst.msk [vmem:[#allocation3 + $0xf0] sm:$0xff] %vm1806, %v1771
        %1838 = vst.msk [vmem:[#allocation3 + $0xf8] sm:$0xff] %vm1806, %v1773
        %v1839 = vld [vmem:[%s1452 + $0x4] sm:$0xff]
        %v1840 = vld [vmem:[%s1452 + $0xc] sm:$0xff]
        %v1841 = vld [vmem:[%s1452 + $0x1c] sm:$0xff]
        %v1842 = vld [vmem:[%s1452 + $0x24] sm:$0xff]
        %v1843 = vld [vmem:[%s1452 + $0x34] sm:$0xff]
        %v1844 = vld [vmem:[%s1452 + $0x3c] sm:$0xff]
        %v1845 = vld [vmem:[%s1452 + $0x4c] sm:$0xff]
        %v1846 = vld [vmem:[%s1452 + $0x54] sm:$0xff]
        %v1847 = vld [vmem:[%s1452 + $0x64] sm:$0xff]
        %v1848 = vld [vmem:[%s1452 + $0x6c] sm:$0xff]
        %v1849 = vld [vmem:[%s1452 + $0x7c] sm:$0xff]
        %v1850 = vld [vmem:[%s1452 + $0x84] sm:$0xff]
        %v1851 = vld [vmem:[%s1452 + $0x94] sm:$0xff]
        %v1852 = vld [vmem:[%s1452 + $0x9c] sm:$0xff]
        %v1853 = vld [vmem:[%s1452 + $0xac] sm:$0xff]
        %v1854 = vld [vmem:[%s1452 + $0xb4] sm:$0xff]
        %v1855 = vld [vmem:[%s1452 + $0xc4] sm:$0xff]
        %v1856 = vld [vmem:[%s1452 + $0xcc] sm:$0xff]
        %v1857 = vld [vmem:[%s1452 + $0xdc] sm:$0xff]
        %v1858 = vld [vmem:[%s1452 + $0xe4] sm:$0xff]
        %v1859 = vld [vmem:[%s1452 + $0xf4] sm:$0xff]
        %v1860 = vld [vmem:[%s1452 + $0xfc] sm:$0xff]
        %v1861 = vld [vmem:[%s1452 + $0x10c] sm:$0xff]
        %v1862 = vld [vmem:[%s1452 + $0x114] sm:$0xff]
        %v1863 = vld [vmem:[%s1452 + $0x124] sm:$0xff]
        %v1864 = vld [vmem:[%s1452 + $0x12c] sm:$0xff]
        %v1865 = vld [vmem:[%s1452 + $0x13c] sm:$0xff]
        %v1866 = vld [vmem:[%s1452 + $0x144] sm:$0xff]
        %v1867 = vld [vmem:[%s1452 + $0x154] sm:$0xff]
        %v1868 = vld [vmem:[%s1452 + $0x15c] sm:$0xff]
        %v1869 = vld [vmem:[%s1452 + $0x16c] sm:$0xff]
        %v1870 = vld [vmem:[%s1452 + $0x174] sm:$0xff]
        %1903 = vrot.lane.b32.xlu0 %v1839, 64
        %v1904 = vpop.permute.xlu0 %1903
        %1905 = vrot.lane.b32.xlu0 %v1840, 64
        %v1906 = vpop.permute.xlu0 %1905
        %1907 = vrot.lane.b32.xlu0 %v1841, 64
        %v1908 = vpop.permute.xlu0 %1907
        %1909 = vrot.lane.b32.xlu0 %v1842, 64
        %v1910 = vpop.permute.xlu0 %1909
        %1911 = vrot.lane.b32.xlu0 %v1843, 64
        %v1912 = vpop.permute.xlu0 %1911
        %1913 = vrot.lane.b32.xlu0 %v1844, 64
        %v1914 = vpop.permute.xlu0 %1913
        %1915 = vrot.lane.b32.xlu0 %v1845, 64
        %v1916 = vpop.permute.xlu0 %1915
        %1917 = vrot.lane.b32.xlu0 %v1846, 64
        %v1918 = vpop.permute.xlu0 %1917
        %1919 = vrot.lane.b32.xlu0 %v1847, 64
        %v1920 = vpop.permute.xlu0 %1919
        %1921 = vrot.lane.b32.xlu0 %v1848, 64
        %v1922 = vpop.permute.xlu0 %1921
        %1923 = vrot.lane.b32.xlu0 %v1849, 64
        %v1924 = vpop.permute.xlu0 %1923
        %1925 = vrot.lane.b32.xlu0 %v1850, 64
        %v1926 = vpop.permute.xlu0 %1925
        %1927 = vrot.lane.b32.xlu0 %v1851, 64
        %v1928 = vpop.permute.xlu0 %1927
        %1929 = vrot.lane.b32.xlu0 %v1852, 64
        %v1930 = vpop.permute.xlu0 %1929
        %1931 = vrot.lane.b32.xlu0 %v1853, 64
        %v1932 = vpop.permute.xlu0 %1931
        %1933 = vrot.lane.b32.xlu0 %v1854, 64
        %v1934 = vpop.permute.xlu0 %1933
        %1935 = vrot.lane.b32.xlu0 %v1855, 64
        %v1936 = vpop.permute.xlu0 %1935
        %1937 = vrot.lane.b32.xlu0 %v1856, 64
        %v1938 = vpop.permute.xlu0 %1937
        %1939 = vrot.lane.b32.xlu0 %v1857, 64
        %v1940 = vpop.permute.xlu0 %1939
        %1941 = vrot.lane.b32.xlu0 %v1858, 64
        %v1942 = vpop.permute.xlu0 %1941
        %1943 = vrot.lane.b32.xlu0 %v1859, 64
        %v1944 = vpop.permute.xlu0 %1943
        %1945 = vrot.lane.b32.xlu0 %v1860, 64
        %v1946 = vpop.permute.xlu0 %1945
        %1947 = vrot.lane.b32.xlu0 %v1861, 64
        %v1948 = vpop.permute.xlu0 %1947
        %1949 = vrot.lane.b32.xlu0 %v1862, 64
        %v1950 = vpop.permute.xlu0 %1949
        %1951 = vrot.lane.b32.xlu0 %v1863, 64
        %v1952 = vpop.permute.xlu0 %1951
        %1953 = vrot.lane.b32.xlu0 %v1864, 64
        %v1954 = vpop.permute.xlu0 %1953
        %1955 = vrot.lane.b32.xlu0 %v1865, 64
        %v1956 = vpop.permute.xlu0 %1955
        %1957 = vrot.lane.b32.xlu0 %v1866, 64
        %v1958 = vpop.permute.xlu0 %1957
        %1959 = vrot.lane.b32.xlu0 %v1867, 64
        %v1960 = vpop.permute.xlu0 %1959
        %1961 = vrot.lane.b32.xlu0 %v1868, 64
        %v1962 = vpop.permute.xlu0 %1961
        %1963 = vrot.lane.b32.xlu0 %v1869, 64
        %v1964 = vpop.permute.xlu0 %1963
        %1965 = vrot.lane.b32.xlu0 %v1870, 64
        %v1966 = vpop.permute.xlu0 %1965
        %vm1999 = vcmask 589312
        %2000 = vst.msk [vmem:[#allocation3] sm:$0xff] %vm1999, %v1904
        %2001 = vst.msk [vmem:[#allocation3 + $0x8] sm:$0xff] %vm1999, %v1906
        %2002 = vst.msk [vmem:[#allocation3 + $0x10] sm:$0xff] %vm1999, %v1908
        %2003 = vst.msk [vmem:[#allocation3 + $0x18] sm:$0xff] %vm1999, %v1910
        %2004 = vst.msk [vmem:[#allocation3 + $0x20] sm:$0xff] %vm1999, %v1912
        %2005 = vst.msk [vmem:[#allocation3 + $0x28] sm:$0xff] %vm1999, %v1914
        %2006 = vst.msk [vmem:[#allocation3 + $0x30] sm:$0xff] %vm1999, %v1916
        %2007 = vst.msk [vmem:[#allocation3 + $0x38] sm:$0xff] %vm1999, %v1918
        %2008 = vst.msk [vmem:[#allocation3 + $0x40] sm:$0xff] %vm1999, %v1920
        %2009 = vst.msk [vmem:[#allocation3 + $0x48] sm:$0xff] %vm1999, %v1922
        %2010 = vst.msk [vmem:[#allocation3 + $0x50] sm:$0xff] %vm1999, %v1924
        %2011 = vst.msk [vmem:[#allocation3 + $0x58] sm:$0xff] %vm1999, %v1926
        %2012 = vst.msk [vmem:[#allocation3 + $0x60] sm:$0xff] %vm1999, %v1928
        %2013 = vst.msk [vmem:[#allocation3 + $0x68] sm:$0xff] %vm1999, %v1930
        %2014 = vst.msk [vmem:[#allocation3 + $0x70] sm:$0xff] %vm1999, %v1932
        %2015 = vst.msk [vmem:[#allocation3 + $0x78] sm:$0xff] %vm1999, %v1934
        %2016 = vst.msk [vmem:[#allocation3 + $0x80] sm:$0xff] %vm1999, %v1936
        %2017 = vst.msk [vmem:[#allocation3 + $0x88] sm:$0xff] %vm1999, %v1938
        %2018 = vst.msk [vmem:[#allocation3 + $0x90] sm:$0xff] %vm1999, %v1940
        %2019 = vst.msk [vmem:[#allocation3 + $0x98] sm:$0xff] %vm1999, %v1942
        %2020 = vst.msk [vmem:[#allocation3 + $0xa0] sm:$0xff] %vm1999, %v1944
        %2021 = vst.msk [vmem:[#allocation3 + $0xa8] sm:$0xff] %vm1999, %v1946
        %2022 = vst.msk [vmem:[#allocation3 + $0xb0] sm:$0xff] %vm1999, %v1948
        %2023 = vst.msk [vmem:[#allocation3 + $0xb8] sm:$0xff] %vm1999, %v1950
        %2024 = vst.msk [vmem:[#allocation3 + $0xc0] sm:$0xff] %vm1999, %v1952
        %2025 = vst.msk [vmem:[#allocation3 + $0xc8] sm:$0xff] %vm1999, %v1954
        %2026 = vst.msk [vmem:[#allocation3 + $0xd0] sm:$0xff] %vm1999, %v1956
        %2027 = vst.msk [vmem:[#allocation3 + $0xd8] sm:$0xff] %vm1999, %v1958
        %2028 = vst.msk [vmem:[#allocation3 + $0xe0] sm:$0xff] %vm1999, %v1960
        %2029 = vst.msk [vmem:[#allocation3 + $0xe8] sm:$0xff] %vm1999, %v1962
        %2030 = vst.msk [vmem:[#allocation3 + $0xf0] sm:$0xff] %vm1999, %v1964
        %2031 = vst.msk [vmem:[#allocation3 + $0xf8] sm:$0xff] %vm1999, %v1966
        %v2032 = vld [vmem:[#allocation3] sm:$0xff]
        %v2033 = vld [vmem:[#allocation3 + $0x8] sm:$0xff]
        %v2034 = vld [vmem:[#allocation3 + $0x10] sm:$0xff]
        %v2035 = vld [vmem:[#allocation3 + $0x18] sm:$0xff]
        %v2036 = vld [vmem:[#allocation3 + $0x20] sm:$0xff]
        %v2037 = vld [vmem:[#allocation3 + $0x28] sm:$0xff]
        %v2038 = vld [vmem:[#allocation3 + $0x30] sm:$0xff]
        %v2039 = vld [vmem:[#allocation3 + $0x38] sm:$0xff]
        %v2040 = vld [vmem:[#allocation3 + $0x40] sm:$0xff]
        %v2041 = vld [vmem:[#allocation3 + $0x48] sm:$0xff]
        %v2042 = vld [vmem:[#allocation3 + $0x50] sm:$0xff]
        %v2043 = vld [vmem:[#allocation3 + $0x58] sm:$0xff]
        %v2044 = vld [vmem:[#allocation3 + $0x60] sm:$0xff]
        %v2045 = vld [vmem:[#allocation3 + $0x68] sm:$0xff]
        %v2046 = vld [vmem:[#allocation3 + $0x70] sm:$0xff]
        %v2047 = vld [vmem:[#allocation3 + $0x78] sm:$0xff]
        %v2048 = vld [vmem:[#allocation3 + $0x80] sm:$0xff]
        %v2049 = vld [vmem:[#allocation3 + $0x88] sm:$0xff]
        %v2050 = vld [vmem:[#allocation3 + $0x90] sm:$0xff]
        %v2051 = vld [vmem:[#allocation3 + $0x98] sm:$0xff]
        %v2052 = vld [vmem:[#allocation3 + $0xa0] sm:$0xff]
        %v2053 = vld [vmem:[#allocation3 + $0xa8] sm:$0xff]
        %v2054 = vld [vmem:[#allocation3 + $0xb0] sm:$0xff]
        %v2055 = vld [vmem:[#allocation3 + $0xb8] sm:$0xff]
        %v2056 = vld [vmem:[#allocation3 + $0xc0] sm:$0xff]
        %v2057 = vld [vmem:[#allocation3 + $0xc8] sm:$0xff]
        %v2058 = vld [vmem:[#allocation3 + $0xd0] sm:$0xff]
        %v2059 = vld [vmem:[#allocation3 + $0xd8] sm:$0xff]
        %v2060 = vld [vmem:[#allocation3 + $0xe0] sm:$0xff]
        %v2061 = vld [vmem:[#allocation3 + $0xe8] sm:$0xff]
        %v2062 = vld [vmem:[#allocation3 + $0xf0] sm:$0xff]
        %v2063 = vld [vmem:[#allocation3 + $0xf8] sm:$0xff]
        %v2064 = vpack.c.bf16 %v2033, %v2032
        %v2065 = vpack.c.bf16 %v2035, %v2034
        %v2066 = vpack.c.bf16 %v2037, %v2036
        %v2067 = vpack.c.bf16 %v2039, %v2038
        %v2068 = vpack.c.bf16 %v2041, %v2040
        %v2069 = vpack.c.bf16 %v2043, %v2042
        %v2070 = vpack.c.bf16 %v2045, %v2044
        %v2071 = vpack.c.bf16 %v2047, %v2046
        %v2072 = vpack.c.bf16 %v2049, %v2048
        %v2073 = vpack.c.bf16 %v2051, %v2050
        %v2074 = vpack.c.bf16 %v2053, %v2052
        %v2075 = vpack.c.bf16 %v2055, %v2054
        %v2076 = vpack.c.bf16 %v2057, %v2056
        %v2077 = vpack.c.bf16 %v2059, %v2058
        %v2078 = vpack.c.bf16 %v2061, %v2060
        %v2079 = vpack.c.bf16 %v2063, %v2062
        %v2080 = vld [vmem:[%s1] sm:$0xf]
        %v2081 = vld [vmem:[%s1 + $0x4] sm:$0xf]
        %v2082 = vld [vmem:[%s1 + $0x8] sm:$0xf]
        %v2083 = vld [vmem:[%s1 + $0xc] sm:$0xf]
        %v2084 = vld [vmem:[%s1 + $0x10] sm:$0xf]
        %v2085 = vld [vmem:[%s1 + $0x14] sm:$0xf]
        %v2086 = vld [vmem:[%s1 + $0x18] sm:$0xf]
        %v2087 = vld [vmem:[%s1 + $0x1c] sm:$0xf]
        %v2088 = vld [vmem:[%s1 + $0x20] sm:$0xf]
        %v2089 = vld [vmem:[%s2] sm:$0x1]
        %v2091 = vlaneseq
        %v2092 = vshrl.u32 %v2091, 7
        %v2093 = vsub.s32 0, %v2092
        %v2094 = vrot.slane %v2089, %v2093
        %v2105 = vunpack.c.l.b16 %v2080
        %v2106 = vunpack.c.l.b16 %v2081
        %v2107 = vunpack.c.l.b16 %v2082
        %v2108 = vunpack.c.l.b16 %v2083
        %v2109 = vunpack.c.l.b16 %v2084
        %v2110 = vunpack.c.l.b16 %v2085
        %v2111 = vunpack.c.l.b16 %v2086
        %v2112 = vunpack.c.l.b16 %v2087
        %v2113 = vunpack.c.l.b16 %v2088
        %v2114 = vpack.c.b16 %v2106, %v2105
        %v2115 = vpack.c.b16 %v2108, %v2107
        %v2116 = vpack.c.b16 %v2110, %v2109
        %v2117 = vpack.c.b16 %v2112, %v2111
        %v2118 = vpack.c.b16 %v2113, %v2113
        %vm2123 = vcmask 588800
        %v2125 = vsel %vm2123, %v2064, 0
        %v2128 = vsel %vm2123, %v2065, 0
        %v2131 = vsel %vm2123, %v2066, 0
        %v2134 = vsel %vm2123, %v2067, 0
        %v2137 = vsel %vm2123, %v2068, 0
        %v2140 = vsel %vm2123, %v2069, 0
        %v2143 = vsel %vm2123, %v2070, 0
        %v2146 = vsel %vm2123, %v2071, 0
        %v2149 = vsel %vm2123, %v2072, 0
        %v2152 = vsel %vm2123, %v2073, 0
        %v2155 = vsel %vm2123, %v2074, 0
        %v2158 = vsel %vm2123, %v2075, 0
        %v2161 = vsel %vm2123, %v2076, 0
        %v2164 = vsel %vm2123, %v2077, 0
        %v2167 = vsel %vm2123, %v2078, 0
        %v2170 = vsel %vm2123, %v2079, 0
        %vm2172 = vcmask 1043456
        %v2174 = vsel %vm2172, %v2118, 0
        %2176 = vmatprep.subr.bf16.mxu0 0
        %2177 = vmatpush1.bf16.msra.mxu0 %v2114
        %2178 = vmatprep.subr.bf16.mxu0 0
        %2179 = vmatpush1.bf16.msra.mxu0 %v2115
        %2180 = vmatprep.subr.bf16.mxu0 0
        %2181 = vmatpush1.bf16.msra.mxu0 %v2116
        %2182 = vmatprep.subr.bf16.mxu0 0
        %2183 = vmatpush1.bf16.msra.mxu0 %v2117
        %2184 = vmatprep.subr.bf16.mxu0 0
        %2185 = vmatpush1.bf16.msra.mxu0 %v2174
        %2186 = vmatprep.subr.bf16.mxu0 0
        %2187 = vmatpush1.bf16.msra.mxu0 0
        %2188 = vmatprep.subr.bf16.mxu0 0
        %2189 = vmatpush1.bf16.msra.mxu0 0
        %2190 = vmatprep.subr.bf16.mxu0 0
        %2191 = vmatpush1.bf16.msra.mxu0 0
        %2192 = vmatprep.subr.bf16.mxu0 0
        %2193 = vmatpush1.bf16.msra.mxu0 0
        %2194 = vmatprep.subr.bf16.mxu0 0
        %2195 = vmatpush1.bf16.msra.mxu0 0
        %2196 = vmatprep.subr.bf16.mxu0 0
        %2197 = vmatpush1.bf16.msra.mxu0 0
        %2198 = vmatprep.subr.bf16.mxu0 0
        %2199 = vmatpush1.bf16.msra.mxu0 0
        %2200 = vmatprep.subr.bf16.mxu0 0
        %2201 = vmatpush1.bf16.msra.mxu0 0
        %2202 = vmatprep.subr.bf16.mxu0 0
        %2203 = vmatpush1.bf16.msra.mxu0 0
        %2204 = vmatprep.subr.bf16.mxu0 0
        %2205 = vmatpush1.bf16.msra.mxu0 0
        %2206 = vmatprep.subr.bf16.mxu0 0
        %2207 = vmatpush1.bf16.msra.mxu0 0
        %2208 = vmatprep.mubr.bf16.mxu0 0
        %2209 = vmatmul.mubr.bf16.gmra.mrb[0].mxu0 %v2125
        %v2210 = vpop.f32.mrb[0].mxu0
        %v2211 = vadd.f32 %v2094, %v2210
        %v2212 = vpop.f32.mrb[0].mxu0
        %v2213 = vpop.f32.mrb[0].mxu0
        %v2214 = vadd.f32 %v2094, %v2213
        %v2215 = vpop.f32.mrb[0].mxu0
        %2216 = vmatprep.mubr.bf16.mxu0 0
        %2217 = vmatmul.mubr.bf16.gmra.mrb[0].mxu0 %v2128
        %v2218 = vpop.f32.mrb[0].mxu0
        %v2219 = vadd.f32 %v2094, %v2218
        %v2220 = vpop.f32.mrb[0].mxu0
        %v2221 = vpop.f32.mrb[0].mxu0
        %v2222 = vadd.f32 %v2094, %v2221
        %v2223 = vpop.f32.mrb[0].mxu0
        %2224 = vmatprep.mubr.bf16.mxu0 0
        %2225 = vmatmul.mubr.bf16.gmra.mrb[0].mxu0 %v2131
        %v2226 = vpop.f32.mrb[0].mxu0
        %v2227 = vadd.f32 %v2094, %v2226
        %v2228 = vpop.f32.mrb[0].mxu0
        %v2229 = vpop.f32.mrb[0].mxu0
        %v2230 = vadd.f32 %v2094, %v2229
        %v2231 = vpop.f32.mrb[0].mxu0
        %2232 = vmatprep.mubr.bf16.mxu0 0
        %2233 = vmatmul.mubr.bf16.gmra.mrb[0].mxu0 %v2134
        %v2234 = vpop.f32.mrb[0].mxu0
        %v2235 = vadd.f32 %v2094, %v2234
        %v2236 = vpop.f32.mrb[0].mxu0
        %v2237 = vpop.f32.mrb[0].mxu0
        %v2238 = vadd.f32 %v2094, %v2237
        %v2239 = vpop.f32.mrb[0].mxu0
        %2240 = vmatprep.mubr.bf16.mxu0 0
        %2241 = vmatmul.mubr.bf16.gmra.mrb[0].mxu0 %v2137
        %v2242 = vpop.f32.mrb[0].mxu0
        %v2243 = vadd.f32 %v2094, %v2242
        %v2244 = vpop.f32.mrb[0].mxu0
        %v2245 = vpop.f32.mrb[0].mxu0
        %v2246 = vadd.f32 %v2094, %v2245
        %v2247 = vpop.f32.mrb[0].mxu0
        %2248 = vmatprep.mubr.bf16.mxu0 0
        %2249 = vmatmul.mubr.bf16.gmra.mrb[0].mxu0 %v2140
        %v2250 = vpop.f32.mrb[0].mxu0
        %v2251 = vadd.f32 %v2094, %v2250
        %v2252 = vpop.f32.mrb[0].mxu0
        %v2253 = vpop.f32.mrb[0].mxu0
        %v2254 = vadd.f32 %v2094, %v2253
        %v2255 = vpop.f32.mrb[0].mxu0
        %2256 = vmatprep.mubr.bf16.mxu0 0
        %2257 = vmatmul.mubr.bf16.gmra.mrb[0].mxu0 %v2143
        %v2258 = vpop.f32.mrb[0].mxu0
        %v2259 = vadd.f32 %v2094, %v2258
        %v2260 = vpop.f32.mrb[0].mxu0
        %v2261 = vpop.f32.mrb[0].mxu0
        %v2262 = vadd.f32 %v2094, %v2261
        %v2263 = vpop.f32.mrb[0].mxu0
        %2264 = vmatprep.mubr.bf16.mxu0 0
        %2265 = vmatmul.mubr.bf16.gmra.mrb[0].mxu0 %v2146
        %v2266 = vpop.f32.mrb[0].mxu0
        %v2267 = vadd.f32 %v2094, %v2266
        %v2268 = vpop.f32.mrb[0].mxu0
        %v2269 = vpop.f32.mrb[0].mxu0
        %v2270 = vadd.f32 %v2094, %v2269
        %v2271 = vpop.f32.mrb[0].mxu0
        %2272 = vmatprep.mubr.bf16.mxu0 0
        %2273 = vmatmul.mubr.bf16.gmra.mrb[0].mxu0 %v2149
        %v2274 = vpop.f32.mrb[0].mxu0
        %v2275 = vadd.f32 %v2094, %v2274
        %v2276 = vpop.f32.mrb[0].mxu0
        %v2277 = vpop.f32.mrb[0].mxu0
        %v2278 = vadd.f32 %v2094, %v2277
        %v2279 = vpop.f32.mrb[0].mxu0
        %2280 = vmatprep.mubr.bf16.mxu0 0
        %2281 = vmatmul.mubr.bf16.gmra.mrb[0].mxu0 %v2152
        %v2282 = vpop.f32.mrb[0].mxu0
        %v2283 = vadd.f32 %v2094, %v2282
        %v2284 = vpop.f32.mrb[0].mxu0
        %v2285 = vpop.f32.mrb[0].mxu0
        %v2286 = vadd.f32 %v2094, %v2285
        %v2287 = vpop.f32.mrb[0].mxu0
        %2288 = vmatprep.mubr.bf16.mxu0 0
        %2289 = vmatmul.mubr.bf16.gmra.mrb[0].mxu0 %v2155
        %v2290 = vpop.f32.mrb[0].mxu0
        %v2291 = vadd.f32 %v2094, %v2290
        %v2292 = vpop.f32.mrb[0].mxu0
        %v2293 = vpop.f32.mrb[0].mxu0
        %v2294 = vadd.f32 %v2094, %v2293
        %v2295 = vpop.f32.mrb[0].mxu0
        %2296 = vmatprep.mubr.bf16.mxu0 0
        %2297 = vmatmul.mubr.bf16.gmra.mrb[0].mxu0 %v2158
        %v2298 = vpop.f32.mrb[0].mxu0
        %v2299 = vadd.f32 %v2094, %v2298
        %v2300 = vpop.f32.mrb[0].mxu0
        %v2301 = vpop.f32.mrb[0].mxu0
        %v2302 = vadd.f32 %v2094, %v2301
        %v2303 = vpop.f32.mrb[0].mxu0
        %2304 = vmatprep.mubr.bf16.mxu0 0
        %2305 = vmatmul.mubr.bf16.gmra.mrb[0].mxu0 %v2161
        %v2306 = vpop.f32.mrb[0].mxu0
        %v2307 = vadd.f32 %v2094, %v2306
        %v2308 = vpop.f32.mrb[0].mxu0
        %v2309 = vpop.f32.mrb[0].mxu0
        %v2310 = vadd.f32 %v2094, %v2309
        %v2311 = vpop.f32.mrb[0].mxu0
        %2312 = vmatprep.mubr.bf16.mxu0 0
        %2313 = vmatmul.mubr.bf16.gmra.mrb[0].mxu0 %v2164
        %v2314 = vpop.f32.mrb[0].mxu0
        %v2315 = vadd.f32 %v2094, %v2314
        %v2316 = vpop.f32.mrb[0].mxu0
        %v2317 = vpop.f32.mrb[0].mxu0
        %v2318 = vadd.f32 %v2094, %v2317
        %v2319 = vpop.f32.mrb[0].mxu0
        %2320 = vmatprep.mubr.bf16.mxu0 0
        %2321 = vmatmul.mubr.bf16.gmra.mrb[0].mxu0 %v2167
        %v2322 = vpop.f32.mrb[0].mxu0
        %v2323 = vadd.f32 %v2094, %v2322
        %v2324 = vpop.f32.mrb[0].mxu0
        %v2325 = vpop.f32.mrb[0].mxu0
        %v2326 = vadd.f32 %v2094, %v2325
        %v2327 = vpop.f32.mrb[0].mxu0
        %2328 = vmatprep.mubr.bf16.mxu0 0
        %2329 = vmatmul.mubr.bf16.gmra.mrb[0].mxu0 %v2170
        %v2330 = vpop.f32.mrb[0].mxu0
        %v2331 = vadd.f32 %v2094, %v2330
        %v2332 = vpop.f32.mrb[0].mxu0
        %v2333 = vpop.f32.mrb[0].mxu0
        %v2334 = vadd.f32 %v2094, %v2333
        %v2335 = vpop.f32.mrb[0].mxu0
        %2336 = vdwg.mxu0
        %v2337 = vsel %vm264, %v2211, 0.0
        %v2338 = vsel %vm264, %v2214, 0.0
        %v2339 = vadd.f32 %v2337, %v2338
        %v2340 = vsel %vm264, %v2219, 0.0
        %v2341 = vadd.f32 %v2339, %v2340
        %v2342 = vsel %vm264, %v2222, 0.0
        %v2343 = vadd.f32 %v2341, %v2342
        %v2344 = vsel %vm264, %v2227, 0.0
        %v2345 = vadd.f32 %v2343, %v2344
        %v2346 = vsel %vm264, %v2230, 0.0
        %v2347 = vadd.f32 %v2345, %v2346
        %v2348 = vsel %vm264, %v2235, 0.0
        %v2349 = vadd.f32 %v2347, %v2348
        %v2350 = vsel %vm264, %v2238, 0.0
        %v2351 = vadd.f32 %v2349, %v2350
        %v2352 = vsel %vm264, %v2243, 0.0
        %v2353 = vadd.f32 %v2351, %v2352
        %v2354 = vsel %vm264, %v2246, 0.0
        %v2355 = vadd.f32 %v2353, %v2354
        %v2356 = vsel %vm264, %v2251, 0.0
        %v2357 = vadd.f32 %v2355, %v2356
        %v2358 = vsel %vm264, %v2254, 0.0
        %v2359 = vadd.f32 %v2357, %v2358
        %v2360 = vsel %vm264, %v2259, 0.0
        %v2361 = vadd.f32 %v2359, %v2360
        %v2362 = vsel %vm264, %v2262, 0.0
        %v2363 = vadd.f32 %v2361, %v2362
        %v2364 = vsel %vm264, %v2267, 0.0
        %v2365 = vadd.f32 %v2363, %v2364
        %v2366 = vsel %vm264, %v2270, 0.0
        %v2367 = vadd.f32 %v2365, %v2366
        %v2368 = vsel %vm264, %v2275, 0.0
        %v2369 = vadd.f32 %v2367, %v2368
        %v2370 = vsel %vm264, %v2278, 0.0
        %v2371 = vadd.f32 %v2369, %v2370
        %v2372 = vsel %vm264, %v2283, 0.0
        %v2373 = vadd.f32 %v2371, %v2372
        %v2374 = vsel %vm264, %v2286, 0.0
        %v2375 = vadd.f32 %v2373, %v2374
        %v2376 = vsel %vm264, %v2291, 0.0
        %v2377 = vadd.f32 %v2375, %v2376
        %v2378 = vsel %vm264, %v2294, 0.0
        %v2379 = vadd.f32 %v2377, %v2378
        %v2380 = vsel %vm264, %v2299, 0.0
        %v2381 = vadd.f32 %v2379, %v2380
        %v2382 = vsel %vm264, %v2302, 0.0
        %v2383 = vadd.f32 %v2381, %v2382
        %v2384 = vsel %vm264, %v2307, 0.0
        %v2385 = vadd.f32 %v2383, %v2384
        %v2386 = vsel %vm264, %v2310, 0.0
        %v2387 = vadd.f32 %v2385, %v2386
        %v2388 = vsel %vm264, %v2315, 0.0
        %v2389 = vadd.f32 %v2387, %v2388
        %v2390 = vsel %vm264, %v2318, 0.0
        %v2391 = vadd.f32 %v2389, %v2390
        %v2392 = vsel %vm264, %v2323, 0.0
        %v2393 = vadd.f32 %v2391, %v2392
        %v2394 = vsel %vm264, %v2326, 0.0
        %v2395 = vadd.f32 %v2393, %v2394
        %v2396 = vsel %vm264, %v2331, 0.0
        %v2397 = vadd.f32 %v2395, %v2396
        %v2398 = vsel %vm264, %v2334, 0.0
        %v2399 = vadd.f32 %v2397, %v2398
        %v2400 = vrot.slane %v2399, 4
        %v2401 = vadd.f32 %v2399, %v2400
        %v2402 = vrot.slane %v2401, 2
        %v2403 = vadd.f32 %v2401, %v2402
        %v2404 = vrot.slane %v2403, 1
        %v2405 = vadd.f32 %v2403, %v2404
        %v2406 = vmul.f32 %v2211, %v2211
        %v2407 = vmul.f32 %v2214, %v2214
        %v2408 = vmul.f32 %v2219, %v2219
        %v2409 = vmul.f32 %v2222, %v2222
        %v2410 = vmul.f32 %v2227, %v2227
        %v2411 = vmul.f32 %v2230, %v2230
        %v2412 = vmul.f32 %v2235, %v2235
        %v2413 = vmul.f32 %v2238, %v2238
        %v2414 = vmul.f32 %v2243, %v2243
        %v2415 = vmul.f32 %v2246, %v2246
        %v2416 = vmul.f32 %v2251, %v2251
        %v2417 = vmul.f32 %v2254, %v2254
        %v2418 = vmul.f32 %v2259, %v2259
        %v2419 = vmul.f32 %v2262, %v2262
        %v2420 = vmul.f32 %v2267, %v2267
        %v2421 = vmul.f32 %v2270, %v2270
        %v2422 = vmul.f32 %v2275, %v2275
        %v2423 = vmul.f32 %v2278, %v2278
        %v2424 = vmul.f32 %v2283, %v2283
        %v2425 = vmul.f32 %v2286, %v2286
        %v2426 = vmul.f32 %v2291, %v2291
        %v2427 = vmul.f32 %v2294, %v2294
        %v2428 = vmul.f32 %v2299, %v2299
        %v2429 = vmul.f32 %v2302, %v2302
        %v2430 = vmul.f32 %v2307, %v2307
        %v2431 = vmul.f32 %v2310, %v2310
        %v2432 = vmul.f32 %v2315, %v2315
        %v2433 = vmul.f32 %v2318, %v2318
        %v2434 = vmul.f32 %v2323, %v2323
        %v2435 = vmul.f32 %v2326, %v2326
        %v2436 = vmul.f32 %v2331, %v2331
        %v2437 = vmul.f32 %v2334, %v2334
        %v2438 = vsel %vm264, %v2406, 0.0
        %v2439 = vsel %vm264, %v2407, 0.0
        %v2440 = vadd.f32 %v2438, %v2439
        %v2441 = vsel %vm264, %v2408, 0.0
        %v2442 = vadd.f32 %v2440, %v2441
        %v2443 = vsel %vm264, %v2409, 0.0
        %v2444 = vadd.f32 %v2442, %v2443
        %v2445 = vsel %vm264, %v2410, 0.0
        %v2446 = vadd.f32 %v2444, %v2445
        %v2447 = vsel %vm264, %v2411, 0.0
        %v2448 = vadd.f32 %v2446, %v2447
        %v2449 = vsel %vm264, %v2412, 0.0
        %v2450 = vadd.f32 %v2448, %v2449
        %v2451 = vsel %vm264, %v2413, 0.0
        %v2452 = vadd.f32 %v2450, %v2451
        %v2453 = vsel %vm264, %v2414, 0.0
        %v2454 = vadd.f32 %v2452, %v2453
        %v2455 = vsel %vm264, %v2415, 0.0
        %v2456 = vadd.f32 %v2454, %v2455
        %v2457 = vsel %vm264, %v2416, 0.0
        %v2458 = vadd.f32 %v2456, %v2457
        %v2459 = vsel %vm264, %v2417, 0.0
        %v2460 = vadd.f32 %v2458, %v2459
        %v2461 = vsel %vm264, %v2418, 0.0
        %v2462 = vadd.f32 %v2460, %v2461
        %v2463 = vsel %vm264, %v2419, 0.0
        %v2464 = vadd.f32 %v2462, %v2463
        %v2465 = vsel %vm264, %v2420, 0.0
        %v2466 = vadd.f32 %v2464, %v2465
        %v2467 = vsel %vm264, %v2421, 0.0
        %v2468 = vadd.f32 %v2466, %v2467
        %v2469 = vsel %vm264, %v2422, 0.0
        %v2470 = vadd.f32 %v2468, %v2469
        %v2471 = vsel %vm264, %v2423, 0.0
        %v2472 = vadd.f32 %v2470, %v2471
        %v2473 = vsel %vm264, %v2424, 0.0
        %v2474 = vadd.f32 %v2472, %v2473
        %v2475 = vsel %vm264, %v2425, 0.0
        %v2476 = vadd.f32 %v2474, %v2475
        %v2477 = vsel %vm264, %v2426, 0.0
        %v2478 = vadd.f32 %v2476, %v2477
        %v2479 = vsel %vm264, %v2427, 0.0
        %v2480 = vadd.f32 %v2478, %v2479
        %v2481 = vsel %vm264, %v2428, 0.0
        %v2482 = vadd.f32 %v2480, %v2481
        %v2483 = vsel %vm264, %v2429, 0.0
        %v2484 = vadd.f32 %v2482, %v2483
        %v2485 = vsel %vm264, %v2430, 0.0
        %v2486 = vadd.f32 %v2484, %v2485
        %v2487 = vsel %vm264, %v2431, 0.0
        %v2488 = vadd.f32 %v2486, %v2487
        %v2489 = vsel %vm264, %v2432, 0.0
        %v2490 = vadd.f32 %v2488, %v2489
        %v2491 = vsel %vm264, %v2433, 0.0
        %v2492 = vadd.f32 %v2490, %v2491
        %v2493 = vsel %vm264, %v2434, 0.0
        %v2494 = vadd.f32 %v2492, %v2493
        %v2495 = vsel %vm264, %v2435, 0.0
        %v2496 = vadd.f32 %v2494, %v2495
        %v2497 = vsel %vm264, %v2436, 0.0
        %v2498 = vadd.f32 %v2496, %v2497
        %v2499 = vsel %vm264, %v2437, 0.0
        %v2500 = vadd.f32 %v2498, %v2499
        %v2501 = vrot.slane %v2500, 4
        %v2502 = vadd.f32 %v2500, %v2501
        %v2503 = vrot.slane %v2502, 2
        %v2504 = vadd.f32 %v2502, %v2503
        %v2505 = vrot.slane %v2504, 1
        %v2506 = vadd.f32 %v2504, %v2505
        %vm2507 = vcmask 1040384
        %v2508 = vsel %vm2507, %v2405, %v2506
        %vm2509 = vcmask 58368
        %2510 = vst.msk [vmem:[%s255] sm:$0x3] %vm2509, %v2508
        %2511 = vxpose.xlu0.b32.start [1/16] %v2211, 128
        %2512 = vxpose.xlu0.b32.cont [2/16] %v2214, 128
        %2513 = vxpose.xlu0.b32.cont [3/16] %v2219, 128
        %2514 = vxpose.xlu0.b32.cont [4/16] %v2222, 128
        %2515 = vxpose.xlu0.b32.cont [5/16] %v2227, 128
        %2516 = vxpose.xlu0.b32.cont [6/16] %v2230, 128
        %2517 = vxpose.xlu0.b32.cont [7/16] %v2235, 128
        %2518 = vxpose.xlu0.b32.cont [8/16] %v2238, 128
        %2519 = vxpose.xlu0.b32.cont [9/16] %v2243, 128
        %2520 = vxpose.xlu0.b32.cont [10/16] %v2246, 128
        %2521 = vxpose.xlu0.b32.cont [11/16] %v2251, 128
        %2522 = vxpose.xlu0.b32.cont [12/16] %v2254, 128
        %2523 = vxpose.xlu0.b32.cont [13/16] %v2259, 128
        %2524 = vxpose.xlu0.b32.cont [14/16] %v2262, 128
        %2525 = vxpose.xlu0.b32.cont [15/16] %v2267, 128
        %2526 = vxpose.xlu0.b32.end [16/16] %v2270, 128
        %v2527 = vpop.trf.xlu0
        %v2528 = vpop.trf.xlu0
        %v2529 = vpop.trf.xlu0
        %v2530 = vpop.trf.xlu0
        %v2531 = vpop.trf.xlu0
        %v2532 = vpop.trf.xlu0
        %v2533 = vpop.trf.xlu0
        %v2534 = vpop.trf.xlu0
        %v2535 = vpop.trf.xlu0
        %v2536 = vpop.trf.xlu0
        %v2537 = vpop.trf.xlu0
        %v2538 = vpop.trf.xlu0
        %v2539 = vpop.trf.xlu0
        %v2540 = vpop.trf.xlu0
        %v2541 = vpop.trf.xlu0
        %v2542 = vpop.trf.xlu0
        %2543 = vxpose.xlu0.b32.start [1/16] %v2275, 128
        %2544 = vxpose.xlu0.b32.cont [2/16] %v2278, 128
        %2545 = vxpose.xlu0.b32.cont [3/16] %v2283, 128
        %2546 = vxpose.xlu0.b32.cont [4/16] %v2286, 128
        %2547 = vxpose.xlu0.b32.cont [5/16] %v2291, 128
        %2548 = vxpose.xlu0.b32.cont [6/16] %v2294, 128
        %2549 = vxpose.xlu0.b32.cont [7/16] %v2299, 128
        %2550 = vxpose.xlu0.b32.cont [8/16] %v2302, 128
        %2551 = vxpose.xlu0.b32.cont [9/16] %v2307, 128
        %2552 = vxpose.xlu0.b32.cont [10/16] %v2310, 128
        %2553 = vxpose.xlu0.b32.cont [11/16] %v2315, 128
        %2554 = vxpose.xlu0.b32.cont [12/16] %v2318, 128
        %2555 = vxpose.xlu0.b32.cont [13/16] %v2323, 128
        %2556 = vxpose.xlu0.b32.cont [14/16] %v2326, 128
        %2557 = vxpose.xlu0.b32.cont [15/16] %v2331, 128
        %2558 = vxpose.xlu0.b32.end [16/16] %v2334, 128
        %v2559 = vpop.trf.xlu0
        %v2560 = vpop.trf.xlu0
        %v2561 = vpop.trf.xlu0
        %v2562 = vpop.trf.xlu0
        %v2563 = vpop.trf.xlu0
        %v2564 = vpop.trf.xlu0
        %v2565 = vpop.trf.xlu0
        %v2566 = vpop.trf.xlu0
        %v2567 = vpop.trf.xlu0
        %v2568 = vpop.trf.xlu0
        %v2569 = vpop.trf.xlu0
        %v2570 = vpop.trf.xlu0
        %v2571 = vpop.trf.xlu0
        %v2572 = vpop.trf.xlu0
        %v2573 = vpop.trf.xlu0
        %v2574 = vpop.trf.xlu0
        %2575 = vst [vmem:[%s248] sm:$0xff] %v2527
        %2576 = vst [vmem:[%s248 + $0x8] sm:$0xff] %v2559
        %s2577 = sand.u32 %s142, 1
        %s2578 = scalar_lea.sflag [#allocation5], %s2577
        %s2579 = sand.u32 %s142, 1
        %s2580 = smul.addr %s2579, 16
        %s2581 = scalar_lea.vmem [#allocation4], %s2580
        %s2582 = sand.u32 %s168, 1
        %s2583 = scalar_lea.sflag [#allocation7], %s2582
        %s2584 = sand.u32 %s168, 1
        %s2585 = smul.addr %s2584, 2
        %s2586 = scalar_lea.vmem [#allocation6], %s2585
        // Predicated region
        $region41: #{tpu_custom_call.1} parent=39 // pred_check
          %p2587 = pneg %p152
        $region42: #{tpu_custom_call.1} parent=39 // pred_check_branch
          %2589 = sbr.rel (%p2587) target = $region44
        $region43: #{tpu_custom_call.1} parent=39 // pred_region
          %s2591 = ssub.s32 256, 256
          %2592 = vsyncadd %s2578, %s2591
          %s2593 = smul.addr %s24, 2
          %s2594 = smul.addr %s2593, 128
          %s2595 = scalar_lea.hbm %s5, %s2594
          %s2597 = sshll.u32 %s2581, 4
          %s2598 = int_to_ptr.vmem [resolvable:$true] %s2597
          %2600 = dma.vmem_to_hbm [thread:$0]  %s2598, 256, %s2595, %s2578
        $region44: #{tpu_custom_call.1} parent=39 // pred_fallthru
          _
        // Predicated region
        $region45: #{tpu_custom_call.1} parent=39 // pred_check
          %p2601 = pneg %p178
        $region46: #{tpu_custom_call.1} parent=39 // pred_check_branch
          %2603 = sbr.rel (%p2601) target = $region48
        $region47: #{tpu_custom_call.1} parent=39 // pred_region
          %s2605 = ssub.s32 32, 32
          %2606 = vsyncadd %s2583, %s2605
          %s2607 = smul.addr %s24, 32
          %s2608 = scalar_lea.hbm %s6, %s2607
          %s2610 = sshll.u32 %s2586, 4
          %s2611 = int_to_ptr.vmem [resolvable:$true] %s2610
          %2613 = dma.vmem_to_hbm [thread:$0]  %s2611, 32, %s2608, %s2583
        $region48: #{tpu_custom_call.1} parent=39 // pred_fallthru
          _
      $region40: #{tpu_custom_call.1} parent=5 // pred_fallthru
        _
      %p2614 = scmp.le.s32.totalorder 2, %s19
      // Predicated region
      $region49: #{tpu_custom_call.1} parent=5 // pred_check
        %p2615 = pneg %p2614
      $region50: #{tpu_custom_call.1} parent=5 // pred_check_branch
        %2617 = sbr.rel (%p2615) target = $region52
      $region51: #{tpu_custom_call.1} parent=5 // pred_region
        %s2618 = ssub.s32 %s19, 2
        // Predicated region
        $region53: #{tpu_custom_call.1} parent=51 // pred_check
          %p2619 = pneg %p158
        $region54: #{tpu_custom_call.1} parent=51 // pred_check_branch
          %2621 = sbr.rel (%p2619) target = $region56
        $region55: #{tpu_custom_call.1} parent=51 // pred_region
          %s2622 = sand.u32 %s143, 1
          %s2623 = scalar_lea.sflag [#allocation5], %s2622
          %s2624 = sand.u32 %s143, 1
          %s2625 = smul.addr %s2624, 16
          %s2626 = scalar_lea.vmem [#allocation4], %s2625
          %2627 = dma.done %s2623, 256
        $region56: #{tpu_custom_call.1} parent=51 // pred_fallthru
          _
        // Predicated region
        $region57: #{tpu_custom_call.1} parent=51 // pred_check
          %p2628 = pneg %p184
        $region58: #{tpu_custom_call.1} parent=51 // pred_check_branch
          %2630 = sbr.rel (%p2628) target = $region60
        $region59: #{tpu_custom_call.1} parent=51 // pred_region
          %s2631 = sand.u32 %s169, 1
          %s2632 = scalar_lea.sflag [#allocation7], %s2631
          %s2633 = sand.u32 %s169, 1
          %s2634 = smul.addr %s2633, 2
          %s2635 = scalar_lea.vmem [#allocation6], %s2634
          %2636 = dma.done %s2632, 32
        $region60: #{tpu_custom_call.1} parent=51 // pred_fallthru
          _
      $region52: #{tpu_custom_call.1} parent=5 // pred_fallthru
        _
    $region6: #{tpu_custom_call.1} parent=1 // loop_footer
      %s23 = sadd.s32 1, %s19
    $region7: #{tpu_custom_call.1} parent=1 // loop_footer_branch
      %18 = sbr.rel target = $region3
    $region8: #{tpu_custom_call.1} parent=1 // loop_exit
      _
    %2637 = vsyncpa [#allocation5], 1
    %s2638 = scalar_lea.sflag [#allocation5], 1
    %2639 = vsyncpa %s2638, 1
    %2640 = vsyncpa [#allocation7], 1
    %s2641 = scalar_lea.sflag [#allocation7], 1
    %2642 = vsyncpa %s2641, 1

</llo_original>
